<compile_context>
chip_gen: v7x
topology: tpu7x:2x2x1
jax: 0.10.0
libtpu: 0.0.40
codegen_flags: <defaults>
</compile_context>

<pallas_src>
import functools

import jax
import jax.numpy as jnp
import numpy as np
from jax.experimental import pallas as pl
from jax.experimental.pallas import tpu as pltpu


def _round_up(x, m):
    return ((x + m - 1) // m) * m


def _gru_cell_kernel(x_ref, h_ref, wih_ref, whh_ref, bih_ref, bhh_ref, o_ref,
                     *, hidden_dim):
    """One batch tile of a GRUCell forward.

    x_ref:   (tile_b, M)     messages tile
    h_ref:   (tile_b, H)     memory (hidden state) tile
    wih_ref: (M, 3H)         input-to-hidden weight, transposed, resident
    whh_ref: (H, 3H)         hidden-to-hidden weight, transposed, resident
    bih_ref: (1, 3H)         input bias, resident
    bhh_ref: (1, 3H)         hidden bias, resident
    o_ref:   (tile_b, H)     updated memory tile
    """
    H = hidden_dim
    x = x_ref[...]
    h = h_ref[...]

    # Two MXU matmuls with f32 accumulation, biases broadcast across rows.
    gi = jnp.dot(x, wih_ref[...], preferred_element_type=jnp.float32) + bih_ref[...]
    gh = jnp.dot(h, whh_ref[...], preferred_element_type=jnp.float32) + bhh_ref[...]

    # Static, lane-aligned slices (H is a multiple of 128 in the demo shapes).
    i_r, i_z, i_n = gi[:, 0:H], gi[:, H:2 * H], gi[:, 2 * H:3 * H]
    h_r, h_z, h_n = gh[:, 0:H], gh[:, H:2 * H], gh[:, 2 * H:3 * H]

    # Gate math on the VPU/EUP (sigmoid/tanh go to the EUP slot).
    r = jax.nn.sigmoid(i_r + h_r)
    z = jax.nn.sigmoid(i_z + h_z)
    n = jnp.tanh(i_n + r * h_n)

    o_ref[...] = (1.0 - z) * n + z * h


def gru_memory_updater(messages, memory, w_ih, w_hh, b_ih, b_hh, *, tile_b=1024):
    """Pallas GRUMemoryUpdater forward.

    messages: (B, M) float32
    memory:   (B, H) float32
    w_ih:     (3H, M) float32   (torch GRUCell weight_ih)
    w_hh:     (3H, H) float32   (torch GRUCell weight_hh)
    b_ih:     (3H,)  float32
    b_hh:     (3H,)  float32
    returns:  (B, H) float32 updated memory
    """
    messages = jnp.asarray(messages, jnp.float32)
    memory = jnp.asarray(memory, jnp.float32)
    B, M = messages.shape
    H = memory.shape[1]

    # Pre-transpose weights once (trace-time) so the kernel matmuls are
    # (tile_b, M) @ (M, 3H) and (tile_b, H) @ (H, 3H).
    wih_t = jnp.asarray(w_ih, jnp.float32).T              # (M, 3H)
    whh_t = jnp.asarray(w_hh, jnp.float32).T              # (H, 3H)
    bih = jnp.asarray(b_ih, jnp.float32).reshape(1, 3 * H)
    bhh = jnp.asarray(b_hh, jnp.float32).reshape(1, 3 * H)

    # Choose a row tile: large (amortizes per-step overhead) but never larger
    # than the (8-rounded) batch, and always a multiple of 8 sublanes.
    tile_b = max(8, min(tile_b, _round_up(B, 8)))
    tile_b = _round_up(tile_b, 8)

    # Handle ragged batches (common for TGN event batches): zero-pad rows,
    # compute, then slice the padding back off.
    Bp = _round_up(B, tile_b)
    if Bp != B:
        pad = Bp - B
        messages = jnp.pad(messages, ((0, pad), (0, 0)))
        memory = jnp.pad(memory, ((0, pad), (0, 0)))

    grid = (Bp // tile_b,)
    kernel = functools.partial(_gru_cell_kernel, hidden_dim=H)

    out = pl.pallas_call(
        kernel,
        out_shape=jax.ShapeDtypeStruct((Bp, H), jnp.float32),
        grid_spec=pltpu.PrefetchScalarGridSpec(
            num_scalar_prefetch=0,
            grid=grid,
            in_specs=[
                pl.BlockSpec((tile_b, M), lambda i: (i, 0)),       # messages tile
                pl.BlockSpec((tile_b, H), lambda i: (i, 0)),       # memory tile
                pl.BlockSpec((M, 3 * H), lambda i: (0, 0)),        # W_ih^T (resident)
                pl.BlockSpec((H, 3 * H), lambda i: (0, 0)),        # W_hh^T (resident)
                pl.BlockSpec((1, 3 * H), lambda i: (0, 0)),        # b_ih (resident)
                pl.BlockSpec((1, 3 * H), lambda i: (0, 0)),        # b_hh (resident)
            ],
            out_specs=pl.BlockSpec((tile_b, H), lambda i: (i, 0)),  # lane-dense when H % 128 == 0
        ),
        compiler_params=pltpu.CompilerParams(
            dimension_semantics=("parallel",),
        ),
    )(messages, memory, wih_t, whh_t, bih, bhh)

    if Bp != B:
        out = out[:B]
    return out


def _gru_cell_ref(x, h, w_ih, w_hh, b_ih, b_hh):
    """Pure-JAX reference matching torch.nn.GRUCell."""
    H = h.shape[1]
    gi = x @ w_ih.T + b_ih
    gh = h @ w_hh.T + b_hh
    r = jax.nn.sigmoid(gi[:, :H] + gh[:, :H])
    z = jax.nn.sigmoid(gi[:, H:2 * H] + gh[:, H:2 * H])
    n = jnp.tanh(gi[:, 2 * H:] + r * gh[:, 2 * H:])
    return (1.0 - z) * n + z * h


if __name__ == "__main__":
    # Shapes implied by the module: messages (B, message_dim), memory (B, memory_dim).
    # message_dim / memory_dim chosen as 128 for lane-dense layouts; B is ragged
    # on purpose to exercise the padding path.
    message_dim = 128
    memory_dim = 128
    batch = 300

    key = jax.random.PRNGKey(0)
    k_msg, k_mem, k_wih, k_whh, k_bih, k_bhh = jax.random.split(key, 6)

    # PyTorch GRUCell init: uniform(-1/sqrt(H), 1/sqrt(H)) for all params.
    bound = 1.0 / np.sqrt(memory_dim)
    w_ih = jax.random.uniform(k_wih, (3 * memory_dim, message_dim),
                              minval=-bound, maxval=bound, dtype=jnp.float32)
    w_hh = jax.random.uniform(k_whh, (3 * memory_dim, memory_dim),
                              minval=-bound, maxval=bound, dtype=jnp.float32)
    b_ih = jax.random.uniform(k_bih, (3 * memory_dim,),
                              minval=-bound, maxval=bound, dtype=jnp.float32)
    b_hh = jax.random.uniform(k_bhh, (3 * memory_dim,),
                              minval=-bound, maxval=bound, dtype=jnp.float32)

    messages = jax.random.normal(k_msg, (batch, message_dim), dtype=jnp.float32)
    memory = jax.random.normal(k_mem, (batch, memory_dim), dtype=jnp.float32)

    out = gru_memory_updater(messages, memory, w_ih, w_hh, b_ih, b_hh, tile_b=128)
    out = jax.block_until_ready(out)

    ref = _gru_cell_ref(messages, memory, w_ih, w_hh, b_ih, b_hh)
    assert out.shape == (batch, memory_dim)
    np.testing.assert_allclose(np.asarray(out), np.asarray(ref), rtol=2e-4, atol=2e-4)

    print("KERNEL_OK")
</pallas_src>

<mosaic_0001>
module attributes {stable_mosaic.version = 11 : i64} {
  func.func @_gru_cell_kernel(%arg0: i32, %arg1: memref<128x128xf32, #tpu.memory_space<vmem>>, %arg2: memref<128x128xf32, #tpu.memory_space<vmem>>, %arg3: memref<128x384xf32, #tpu.memory_space<vmem>>, %arg4: memref<128x384xf32, #tpu.memory_space<vmem>>, %arg5: memref<1x384xf32, #tpu.memory_space<vmem>>, %arg6: memref<1x384xf32, #tpu.memory_space<vmem>>, %arg7: memref<128x128xf32, #tpu.memory_space<vmem>>) attributes {dimension_semantics = [#tpu.dimension_semantics<parallel>], iteration_bounds = array<i64: 3>, scalar_prefetch = 0 : i64, scratch_operands = 0 : i64, tpu.core_type = #tpu.core_type<tc>, window_params = [{transform_indices = @transform_0, window_bounds = array<i64: 128, 128>}, {transform_indices = @transform_1, window_bounds = array<i64: 128, 128>}, {pipeline_mode = #tpu.pipeline_mode<synchronous>, transform_indices = @transform_2, window_bounds = array<i64: 128, 384>}, {pipeline_mode = #tpu.pipeline_mode<synchronous>, transform_indices = @transform_3, window_bounds = array<i64: 128, 384>}, {pipeline_mode = #tpu.pipeline_mode<synchronous>, transform_indices = @transform_4, window_bounds = array<i64: 1, 384>}, {pipeline_mode = #tpu.pipeline_mode<synchronous>, transform_indices = @transform_5, window_bounds = array<i64: 1, 384>}, {transform_indices = @transform_6, window_bounds = array<i64: 128, 128>}]} {
    %c0 = arith.constant 0 : index
    %c0_0 = arith.constant 0 : index
    %0 = vector.load %arg1[%c0, %c0_0] : memref<128x128xf32, #tpu.memory_space<vmem>>, vector<128x128xf32>
    %c0_1 = arith.constant 0 : index
    %c0_2 = arith.constant 0 : index
    %1 = vector.load %arg2[%c0_1, %c0_2] : memref<128x128xf32, #tpu.memory_space<vmem>>, vector<128x128xf32>
    %c0_3 = arith.constant 0 : index
    %c0_4 = arith.constant 0 : index
    %2 = vector.load %arg3[%c0_3, %c0_4] : memref<128x384xf32, #tpu.memory_space<vmem>>, vector<128x384xf32>
    %cst = arith.constant dense<0.000000e+00> : vector<128x384xf32>
    %3 = tpu.matmul %0, %2, %cst {dimension_numbers = #tpu.dot_dimension_numbers<[1], [0], [0], [1], [0, 0, 1, 1], [], []>} : vector<128x128xf32>, vector<128x384xf32>, vector<128x384xf32> -> vector<128x384xf32>
    %c0_5 = arith.constant 0 : index
    %c0_6 = arith.constant 0 : index
    %4 = vector.load %arg5[%c0_5, %c0_6] : memref<1x384xf32, #tpu.memory_space<vmem>>, vector<1x384xf32>
    %5 = vector.broadcast %4 : vector<1x384xf32> to vector<128x384xf32>
    %6 = arith.addf %3, %5 : vector<128x384xf32>
    %c0_7 = arith.constant 0 : index
    %c0_8 = arith.constant 0 : index
    %7 = vector.load %arg4[%c0_7, %c0_8] : memref<128x384xf32, #tpu.memory_space<vmem>>, vector<128x384xf32>
    %cst_9 = arith.constant dense<0.000000e+00> : vector<128x384xf32>
    %8 = tpu.matmul %1, %7, %cst_9 {dimension_numbers = #tpu.dot_dimension_numbers<[1], [0], [0], [1], [0, 0, 1, 1], [], []>} : vector<128x128xf32>, vector<128x384xf32>, vector<128x384xf32> -> vector<128x384xf32>
    %c0_10 = arith.constant 0 : index
    %c0_11 = arith.constant 0 : index
    %9 = vector.load %arg6[%c0_10, %c0_11] : memref<1x384xf32, #tpu.memory_space<vmem>>, vector<1x384xf32>
    %10 = vector.broadcast %9 : vector<1x384xf32> to vector<128x384xf32>
    %11 = arith.addf %8, %10 : vector<128x384xf32>
    %12 = vector.extract_strided_slice %6 {offsets = [0, 0], sizes = [128, 128], strides = [1, 1]} : vector<128x384xf32> to vector<128x128xf32>
    %13 = vector.extract_strided_slice %6 {offsets = [0, 128], sizes = [128, 128], strides = [1, 1]} : vector<128x384xf32> to vector<128x128xf32>
    %14 = vector.extract_strided_slice %6 {offsets = [0, 256], sizes = [128, 128], strides = [1, 1]} : vector<128x384xf32> to vector<128x128xf32>
    %15 = vector.extract_strided_slice %11 {offsets = [0, 0], sizes = [128, 128], strides = [1, 1]} : vector<128x384xf32> to vector<128x128xf32>
    %16 = vector.extract_strided_slice %11 {offsets = [0, 128], sizes = [128, 128], strides = [1, 1]} : vector<128x384xf32> to vector<128x128xf32>
    %17 = vector.extract_strided_slice %11 {offsets = [0, 256], sizes = [128, 128], strides = [1, 1]} : vector<128x384xf32> to vector<128x128xf32>
    %18 = arith.addf %12, %15 : vector<128x128xf32>
    %19 = arith.negf %18 : vector<128x128xf32>
    %20 = math.exp %19 : vector<128x128xf32>
    %cst_12 = arith.constant 1.000000e+00 : f32
    %21 = vector.broadcast %cst_12 : f32 to vector<128x128xf32>
    %22 = arith.addf %21, %20 : vector<128x128xf32>
    %23 = arith.divf %21, %22 : vector<128x128xf32>
    %24 = arith.addf %13, %16 : vector<128x128xf32>
    %25 = arith.negf %24 : vector<128x128xf32>
    %26 = math.exp %25 : vector<128x128xf32>
    %cst_13 = arith.constant 1.000000e+00 : f32
    %27 = vector.broadcast %cst_13 : f32 to vector<128x128xf32>
    %28 = arith.addf %27, %26 : vector<128x128xf32>
    %29 = arith.divf %27, %28 : vector<128x128xf32>
    %30 = arith.mulf %23, %17 : vector<128x128xf32>
    %31 = arith.addf %14, %30 : vector<128x128xf32>
    %32 = math.tanh %31 : vector<128x128xf32>
    %cst_14 = arith.constant 1.000000e+00 : f32
    %33 = vector.broadcast %cst_14 : f32 to vector<128x128xf32>
    %34 = arith.subf %33, %29 : vector<128x128xf32>
    %35 = arith.mulf %34, %32 : vector<128x128xf32>
    %36 = arith.mulf %29, %1 : vector<128x128xf32>
    %37 = arith.addf %35, %36 : vector<128x128xf32>
    %c0_15 = arith.constant 0 : index
    %c0_16 = arith.constant 0 : index
    %38 = vector.load %arg7[%c0_15, %c0_16] : memref<128x128xf32, #tpu.memory_space<vmem>>, vector<128x128xf32>
    tpu.vector_store %arg7[%c0_15, %c0_16], %37 {strides = array<i32>} : memref<128x128xf32, #tpu.memory_space<vmem>>, vector<128x128xf32>,
    return
  }
  func.func @transform_0(%arg0: i32) -> (i32, i32) {
    %c0_i32 = arith.constant 0 : i32
    %c0_i32_0 = arith.constant 0 : i32
    return %arg0, %c0_i32 : i32, i32
  }
  func.func @transform_1(%arg0: i32) -> (i32, i32) {
    %c0_i32 = arith.constant 0 : i32
    %c0_i32_0 = arith.constant 0 : i32
    return %arg0, %c0_i32 : i32, i32
  }
  func.func @transform_2(%arg0: i32) -> (i32, i32) {
    %c0_i32 = arith.constant 0 : i32
    %c0_i32_0 = arith.constant 0 : i32
    %c0_i32_1 = arith.constant 0 : i32
    return %c0_i32, %c0_i32_0 : i32, i32
  }
  func.func @transform_3(%arg0: i32) -> (i32, i32) {
    %c0_i32 = arith.constant 0 : i32
    %c0_i32_0 = arith.constant 0 : i32
    %c0_i32_1 = arith.constant 0 : i32
    return %c0_i32, %c0_i32_0 : i32, i32
  }
  func.func @transform_4(%arg0: i32) -> (i32, i32) {
    %c0_i32 = arith.constant 0 : i32
    %c0_i32_0 = arith.constant 0 : i32
    %c0_i32_1 = arith.constant 0 : i32
    return %c0_i32, %c0_i32_0 : i32, i32
  }
  func.func @transform_5(%arg0: i32) -> (i32, i32) {
    %c0_i32 = arith.constant 0 : i32
    %c0_i32_0 = arith.constant 0 : i32
    %c0_i32_1 = arith.constant 0 : i32
    return %c0_i32, %c0_i32_0 : i32, i32
  }
  func.func @transform_6(%arg0: i32) -> (i32, i32) {
    %c0_i32 = arith.constant 0 : i32
    %c0_i32_0 = arith.constant 0 : i32
    return %arg0, %c0_i32 : i32, i32
  }
}

</mosaic_0001>

<llo_original>
// kernel: tpu_custom_call.1
$region0: #{tpu_custom_call.1}
  #allocation0 [shape = 'u32[]', space=smem, size = 0x4, offset = 0x4, fixed_abs, tag = 'smem constant byte address 0x4 - core index']
  #allocation1 [shape = 'u32[144,128]{1,0:T(1,128)}', space=vmem, size = 0x12000, scoped, tag = 'internal scratch']
  %s0 = inlined_call_operand.hbm [shape: f32[384,128], index: 0, kind: input, shape index: {}]
  %s1 = inlined_call_operand.hbm [shape: f32[384,128], index: 1, kind: input, shape index: {}]
  %s2 = inlined_call_operand.hbm [shape: f32[128,384], index: 2, kind: input, shape index: {}]
  %s3 = inlined_call_operand.hbm [shape: f32[128,384], index: 3, kind: input, shape index: {}]
  %s4 = inlined_call_operand.vmem [shape: f32[1,384], index: 4, kind: input, shape index: {}]
  %s5 = inlined_call_operand.vmem [shape: f32[1,384], index: 5, kind: input, shape index: {}]
  %s6 = inlined_call_operand.hbm [shape: f32[384,128], index: 6, kind: output, shape index: {}]
  %s7 = sld [smem:[#allocation0]]
  $region73: #{tpu_custom_call.1} parent=0
    _
  %s9 = ssub.s32 1, %s7
  %s10 = scalar_select 0, %s9, %s7
  $region1: #{tpu_custom_call.1} parent=0
    #allocation2 [shape = 'u8[131072]{0}', space=vmem, size = 0x20000, scoped, tag = 'input window, operand 0']
    #allocation3 [shape = 's32[2]{0}', space=sflag, size = 0x8, scoped, tag = 'scoped memory for tpu_custom_call.1']
    #allocation4 [shape = 's32[2]{0}', space=sflag, size = 0x8, scoped, tag = 'scoped memory for tpu_custom_call.1']
    #allocation5 [shape = 'u8[131072]{0}', space=vmem, size = 0x20000, scoped, tag = 'input window, operand 1']
    #allocation6 [shape = 's32[2]{0}', space=sflag, size = 0x8, scoped, tag = 'scoped memory for tpu_custom_call.1']
    #allocation7 [shape = 'u8[196608]{0}', space=vmem, size = 0x30000, scoped, tag = 'input window, operand 2, single buffered']
    #allocation8 [shape = 'u8[196608]{0}', space=vmem, size = 0x30000, scoped, tag = 'input window, operand 3, single buffered']
    #allocation9 [shape = 's32[1]{0}', space=sflag, size = 0x4, scoped, tag = 'scoped memory for tpu_custom_call.1']
    #allocation10 [shape = 'u8[131072]{0}', space=vmem, size = 0x20000, scoped, tag = 'output window, operand 0']
    %11 = vsyncpa [#allocation3], 0
    %s12 = scalar_lea.sflag [#allocation3], 1
    %13 = vsyncpa %s12, 0
    %14 = vsyncpa [#allocation6], 0
    %s15 = scalar_lea.sflag [#allocation6], 1
    %16 = vsyncpa %s15, 0
    %17 = vsyncpa [#allocation9], 0
    %18 = vsyncpa [#allocation4], 0
    %s19 = scalar_lea.sflag [#allocation4], 1
    %20 = vsyncpa %s19, 0
    loop: start=0, step=1, limit=5
    $region2: #{tpu_custom_call.1} parent=1 // loop_pre_header
      _
    $region3: #{tpu_custom_call.1} parent=1 // loop_header
      %s22 = sphi 0, %s26
      %p23 = scmp.ge.s32.totalorder %s22, 5
      %s32 = sphi 0, %s34
      %s35 = sphi 0, %s32
      %s36 = sphi 0, %s35
      %s52 = sphi 0, %s36
      %s58 = sphi 0, %s60
      %s61 = sphi 0, %s58
      %s62 = sphi 0, %s61
      %s78 = sphi 0, %s62
      %s82 = sphi 0, %s82
      %s84 = sphi 0, %s82
      %s85 = sphi 0, %s84
      %s99 = sphi 0, %s85
      %s103 = sphi 0, %s103
      %s105 = sphi 0, %s103
      %s106 = sphi 0, %s105
      %s120 = sphi 0, %s106
      %s124 = sphi 0, %s124
      %s126 = sphi 0, %s124
      %s127 = sphi 0, %s126
      %s141 = sphi 0, %s127
      %s145 = sphi 0, %s145
      %s147 = sphi 0, %s145
      %s148 = sphi 0, %s147
      %s162 = sphi 0, %s148
      %s168 = sphi 0, %s170
      %s171 = sphi 0, %s168
      %s172 = sphi 0, %s171
      %s188 = sphi 0, %s172
    $region4: #{tpu_custom_call.1} parent=1 // loop_header_branch
      %25 = sbr.rel (%p23) target = $region8
    $region5: #{tpu_custom_call.1} parent=1 // loop_body
      %s27 = ssub.s32 %s22, 1
      %s28 = ssub.s32 %s22, 2
      %s29 = sadd.s32 %s22, 1
      %s30 = ssub.s32 %s22, %s29
      %p31 = scmp.eq.s32.totalorder %s30, 0
      %s33 = sadd.s32 %s32, 1
      %s34 = scalar_select %p31, %s32, %s33
      %p37 = pneg %p31
      %p38 = scmp.eq.s32.totalorder %s22, 2
      %p39 = por %p37, %p38
      %p40 = scmp.ne.s32.totalorder %s32, %s35
      %p41 = scmp.eq.s32.totalorder %s22, 0
      %p42 = por %p40, %p41
      %p43 = scmp.ne.s32.totalorder %s32, %s35
      %p44 = scmp.eq.s32.totalorder %s27, 2
      %p45 = por %p43, %p44
      %p46 = scmp.ne.s32.totalorder %s35, %s36
      %p47 = scmp.eq.s32.totalorder %s27, 0
      %p48 = por %p46, %p47
      %p49 = scmp.ne.s32.totalorder %s35, %s36
      %p50 = scmp.eq.s32.totalorder %s28, 2
      %p51 = por %p49, %p50
      %p53 = scmp.ne.s32.totalorder %s36, %s52
      %p54 = scmp.eq.s32.totalorder %s28, 0
      %p55 = por %p53, %p54
      %s56 = ssub.s32 %s22, %s29
      %p57 = scmp.eq.s32.totalorder %s56, 0
      %s59 = sadd.s32 %s58, 1
      %s60 = scalar_select %p57, %s58, %s59
      %p63 = pneg %p57
      %p64 = scmp.eq.s32.totalorder %s22, 2
      %p65 = por %p63, %p64
      %p66 = scmp.ne.s32.totalorder %s58, %s61
      %p67 = scmp.eq.s32.totalorder %s22, 0
      %p68 = por %p66, %p67
      %p69 = scmp.ne.s32.totalorder %s58, %s61
      %p70 = scmp.eq.s32.totalorder %s27, 2
      %p71 = por %p69, %p70
      %p72 = scmp.ne.s32.totalorder %s61, %s62
      %p73 = scmp.eq.s32.totalorder %s27, 0
      %p74 = por %p72, %p73
      %p75 = scmp.ne.s32.totalorder %s61, %s62
      %p76 = scmp.eq.s32.totalorder %s28, 2
      %p77 = por %p75, %p76
      %p79 = scmp.ne.s32.totalorder %s62, %s78
      %p80 = scmp.eq.s32.totalorder %s28, 0
      %p81 = por %p79, %p80
      %s83 = sadd.s32 %s82, 1
      %p86 = scmp.eq.s32.totalorder %s22, 2
      %p87 = scmp.ne.s32.totalorder %s82, %s84
      %p88 = scmp.eq.s32.totalorder %s22, 0
      %p89 = por %p87, %p88
      %p90 = scmp.ne.s32.totalorder %s82, %s84
      %p91 = scmp.eq.s32.totalorder %s27, 2
      %p92 = por %p90, %p91
      %p93 = scmp.ne.s32.totalorder %s84, %s85
      %p94 = scmp.eq.s32.totalorder %s27, 0
      %p95 = por %p93, %p94
      %p96 = scmp.ne.s32.totalorder %s84, %s85
      %p97 = scmp.eq.s32.totalorder %s28, 2
      %p98 = por %p96, %p97
      %p100 = scmp.ne.s32.totalorder %s85, %s99
      %p101 = scmp.eq.s32.totalorder %s28, 0
      %p102 = por %p100, %p101
      %s104 = sadd.s32 %s103, 1
      %p107 = scmp.eq.s32.totalorder %s22, 2
      %p108 = scmp.ne.s32.totalorder %s103, %s105
      %p109 = scmp.eq.s32.totalorder %s22, 0
      %p110 = por %p108, %p109
      %p111 = scmp.ne.s32.totalorder %s103, %s105
      %p112 = scmp.eq.s32.totalorder %s27, 2
      %p113 = por %p111, %p112
      %p114 = scmp.ne.s32.totalorder %s105, %s106
      %p115 = scmp.eq.s32.totalorder %s27, 0
      %p116 = por %p114, %p115
      %p117 = scmp.ne.s32.totalorder %s105, %s106
      %p118 = scmp.eq.s32.totalorder %s28, 2
      %p119 = por %p117, %p118
      %p121 = scmp.ne.s32.totalorder %s106, %s120
      %p122 = scmp.eq.s32.totalorder %s28, 0
      %p123 = por %p121, %p122
      %s125 = sadd.s32 %s124, 1
      %p128 = scmp.eq.s32.totalorder %s22, 2
      %p129 = scmp.ne.s32.totalorder %s124, %s126
      %p130 = scmp.eq.s32.totalorder %s22, 0
      %p131 = por %p129, %p130
      %p132 = scmp.ne.s32.totalorder %s124, %s126
      %p133 = scmp.eq.s32.totalorder %s27, 2
      %p134 = por %p132, %p133
      %p135 = scmp.ne.s32.totalorder %s126, %s127
      %p136 = scmp.eq.s32.totalorder %s27, 0
      %p137 = por %p135, %p136
      %p138 = scmp.ne.s32.totalorder %s126, %s127
      %p139 = scmp.eq.s32.totalorder %s28, 2
      %p140 = por %p138, %p139
      %p142 = scmp.ne.s32.totalorder %s127, %s141
      %p143 = scmp.eq.s32.totalorder %s28, 0
      %p144 = por %p142, %p143
      %s146 = sadd.s32 %s145, 1
      %p149 = scmp.eq.s32.totalorder %s22, 2
      %p150 = scmp.ne.s32.totalorder %s145, %s147
      %p151 = scmp.eq.s32.totalorder %s22, 0
      %p152 = por %p150, %p151
      %p153 = scmp.ne.s32.totalorder %s145, %s147
      %p154 = scmp.eq.s32.totalorder %s27, 2
      %p155 = por %p153, %p154
      %p156 = scmp.ne.s32.totalorder %s147, %s148
      %p157 = scmp.eq.s32.totalorder %s27, 0
      %p158 = por %p156, %p157
      %p159 = scmp.ne.s32.totalorder %s147, %s148
      %p160 = scmp.eq.s32.totalorder %s28, 2
      %p161 = por %p159, %p160
      %p163 = scmp.ne.s32.totalorder %s148, %s162
      %p164 = scmp.eq.s32.totalorder %s28, 0
      %p165 = por %p163, %p164
      %s166 = ssub.s32 %s22, %s29
      %p167 = scmp.eq.s32.totalorder %s166, 0
      %s169 = sadd.s32 %s168, 1
      %s170 = scalar_select %p167, %s168, %s169
      %p173 = pneg %p167
      %p174 = scmp.eq.s32.totalorder %s22, 2
      %p175 = por %p173, %p174
      %p176 = scmp.ne.s32.totalorder %s168, %s171
      %p177 = scmp.eq.s32.totalorder %s22, 0
      %p178 = por %p176, %p177
      %p179 = scmp.ne.s32.totalorder %s168, %s171
      %p180 = scmp.eq.s32.totalorder %s27, 2
      %p181 = por %p179, %p180
      %p182 = scmp.ne.s32.totalorder %s171, %s172
      %p183 = scmp.eq.s32.totalorder %s27, 0
      %p184 = por %p182, %p183
      %p185 = scmp.ne.s32.totalorder %s171, %s172
      %p186 = scmp.eq.s32.totalorder %s28, 2
      %p187 = por %p185, %p186
      %p189 = scmp.ne.s32.totalorder %s172, %s188
      %p190 = scmp.eq.s32.totalorder %s28, 0
      %p191 = por %p189, %p190
      %p192 = scmp.le.s32.totalorder 1, %s22
      %p193 = scmp.lt.s32.totalorder %s22, 4
      %p194 = pnand %p192, %p193
      %p195 = pneg %p194
      // Predicated region
      $region9: #{tpu_custom_call.1} parent=5 // pred_check
        _
      $region10: #{tpu_custom_call.1} parent=5 // pred_check_branch
        %197 = sbr.rel (%p194) target = $region12
      $region11: #{tpu_custom_call.1} parent=5 // pred_region
        %s198 = ssub.s32 %s22, 1
        // Predicated region
        $region13: #{tpu_custom_call.1} parent=11 // pred_check
          %p199 = pneg %p95
        $region14: #{tpu_custom_call.1} parent=11 // pred_check_branch
          %201 = sbr.rel (%p199) target = $region16
        $region15: #{tpu_custom_call.1} parent=11 // pred_region
          %s203 = ssub.s32 6144, 6144
          %204 = vsyncadd [#allocation6], %s203
          %s205 = sshll.u32 [#allocation7], 4
          %s206 = int_to_ptr.vmem [resolvable:$true] %s205
          %211 = dma.hbm_to_vmem [thread:$0]  %s2, 6144, %s206, [#allocation6], 384, 384, 24
        $region16: #{tpu_custom_call.1} parent=11 // pred_fallthru
          _
        // Predicated region
        $region17: #{tpu_custom_call.1} parent=11 // pred_check
          %p212 = pneg %p116
        $region18: #{tpu_custom_call.1} parent=11 // pred_check_branch
          %214 = sbr.rel (%p212) target = $region20
        $region19: #{tpu_custom_call.1} parent=11 // pred_region
          %s216 = ssub.s32 6144, 6144
          %217 = vsyncadd [#allocation9], %s216
          %s218 = sshll.u32 [#allocation8], 4
          %s219 = int_to_ptr.vmem [resolvable:$true] %s218
          %224 = dma.hbm_to_vmem [thread:$0]  %s3, 6144, %s219, [#allocation9], 384, 384, 24
        $region20: #{tpu_custom_call.1} parent=11 // pred_fallthru
          _
        // Predicated region
        $region21: #{tpu_custom_call.1} parent=11 // pred_check
          %p225 = pneg %p137
        $region22: #{tpu_custom_call.1} parent=11 // pred_check_branch
          %227 = sbr.rel (%p225) target = $region24
        $region23: #{tpu_custom_call.1} parent=11 // pred_region
          _
        $region24: #{tpu_custom_call.1} parent=11 // pred_fallthru
          _
        // Predicated region
        $region25: #{tpu_custom_call.1} parent=11 // pred_check
          %p228 = pneg %p158
        $region26: #{tpu_custom_call.1} parent=11 // pred_check_branch
          %230 = sbr.rel (%p228) target = $region28
        $region27: #{tpu_custom_call.1} parent=11 // pred_region
          _
        $region28: #{tpu_custom_call.1} parent=11 // pred_fallthru
          _
      $region12: #{tpu_custom_call.1} parent=5 // pred_fallthru
        _
      %p231 = scmp.lt.s32.totalorder %s22, 3
      // Predicated region
      $region29: #{tpu_custom_call.1} parent=5 // pred_check
        %p232 = pneg %p231
      $region30: #{tpu_custom_call.1} parent=5 // pred_check_branch
        %234 = sbr.rel (%p232) target = $region32
      $region31: #{tpu_custom_call.1} parent=5 // pred_region
        // Predicated region
        $region33: #{tpu_custom_call.1} parent=31 // pred_check
          %p235 = pneg %p42
        $region34: #{tpu_custom_call.1} parent=31 // pred_check_branch
          %237 = sbr.rel (%p235) target = $region36
        $region35: #{tpu_custom_call.1} parent=31 // pred_region
          %s238 = sand.u32 %s32, 1
          %s239 = scalar_lea.sflag [#allocation3], %s238
          %s240 = sand.u32 %s32, 1
          %s241 = smul.addr %s240, 128
          %s242 = scalar_lea.vmem [#allocation2], %s241
          %s243 = smul.u32 16, %s22
          %s245 = ssub.s32 2048, 2048
          %246 = vsyncadd %s239, %s245
          %s247 = smul.addr %s243, 128
          %s248 = scalar_lea.hbm %s0, %s247
          %s249 = sshll.u32 %s242, 4
          %s250 = int_to_ptr.vmem [resolvable:$true] %s249
          %255 = dma.hbm_to_vmem [thread:$0]  %s248, 2048, %s250, %s239, 128, 128, 8
        $region36: #{tpu_custom_call.1} parent=31 // pred_fallthru
          _
        // Predicated region
        $region37: #{tpu_custom_call.1} parent=31 // pred_check
          %p256 = pneg %p68
        $region38: #{tpu_custom_call.1} parent=31 // pred_check_branch
          %258 = sbr.rel (%p256) target = $region40
        $region39: #{tpu_custom_call.1} parent=31 // pred_region
          %s259 = sand.u32 %s22, 1
          %s260 = scalar_lea.sflag [#allocation6], %s259
          %s261 = sand.u32 %s58, 1
          %s262 = smul.addr %s261, 128
          %s263 = scalar_lea.vmem [#allocation5], %s262
          %s264 = smul.u32 16, %s22
          %s266 = ssub.s32 2048, 2048
          %267 = vsyncadd %s260, %s266
          %s268 = smul.addr %s264, 128
          %s269 = scalar_lea.hbm %s1, %s268
          %s270 = sshll.u32 %s263, 4
          %s271 = int_to_ptr.vmem [resolvable:$true] %s270
          %276 = dma.hbm_to_vmem [thread:$0]  %s269, 2048, %s271, %s260, 128, 128, 8
        $region40: #{tpu_custom_call.1} parent=31 // pred_fallthru
          _
      $region32: #{tpu_custom_call.1} parent=5 // pred_fallthru
        _
      %p277 = scmp.le.s32.totalorder 1, %s22
      %p278 = scmp.lt.s32.totalorder %s22, 4
      %p279 = pnand %p277, %p278
      %p280 = pneg %p279
      // Predicated region
      $region41: #{tpu_custom_call.1} parent=5 // pred_check
        _
      $region42: #{tpu_custom_call.1} parent=5 // pred_check_branch
        %282 = sbr.rel (%p279) target = $region44
      $region43: #{tpu_custom_call.1} parent=5 // pred_region
        %s283 = ssub.s32 %s22, 1
        %s284 = sand.u32 %s35, 1
        %s285 = scalar_lea.sflag [#allocation3], %s284
        %s286 = sand.u32 %s35, 1
        %s287 = smul.addr %s286, 128
        %s288 = scalar_lea.vmem [#allocation2], %s287
        // Predicated region
        $region45: #{tpu_custom_call.1} parent=43 // pred_check
          %p289 = pneg %p48
        $region46: #{tpu_custom_call.1} parent=43 // pred_check_branch
          %291 = sbr.rel (%p289) target = $region48
        $region47: #{tpu_custom_call.1} parent=43 // pred_region
          %292 = dma.done %s285, 2048
        $region48: #{tpu_custom_call.1} parent=43 // pred_fallthru
          _
        %s293 = sand.u32 %s27, 1
        %s294 = scalar_lea.sflag [#allocation6], %s293
        %s295 = sand.u32 %s61, 1
        %s296 = smul.addr %s295, 128
        %s297 = scalar_lea.vmem [#allocation5], %s296
        // Predicated region
        $region49: #{tpu_custom_call.1} parent=43 // pred_check
          %p298 = pneg %p74
        $region50: #{tpu_custom_call.1} parent=43 // pred_check_branch
          %300 = sbr.rel (%p298) target = $region52
        $region51: #{tpu_custom_call.1} parent=43 // pred_region
          %301 = dma.done %s294, 2048
        $region52: #{tpu_custom_call.1} parent=43 // pred_fallthru
          _
        // Predicated region
        $region53: #{tpu_custom_call.1} parent=43 // pred_check
          %p302 = pneg %p95
        $region54: #{tpu_custom_call.1} parent=43 // pred_check_branch
          %304 = sbr.rel (%p302) target = $region56
        $region55: #{tpu_custom_call.1} parent=43 // pred_region
          %305 = dma.done [#allocation6], 6144
        $region56: #{tpu_custom_call.1} parent=43 // pred_fallthru
          _
        // Predicated region
        $region57: #{tpu_custom_call.1} parent=43 // pred_check
          %p306 = pneg %p116
        $region58: #{tpu_custom_call.1} parent=43 // pred_check_branch
          %308 = sbr.rel (%p306) target = $region60
        $region59: #{tpu_custom_call.1} parent=43 // pred_region
          %309 = dma.done [#allocation9], 6144
        $region60: #{tpu_custom_call.1} parent=43 // pred_fallthru
          _
        %s310 = sand.u32 %s35, 1
        %s311 = scalar_lea.sflag [#allocation3], %s310
        %s312 = sand.u32 %s35, 1
        %s313 = smul.addr %s312, 128
        %s314 = scalar_lea.vmem [#allocation2], %s313
        %p315 = pneg %p48
        %p316 = pneg %p45
        %s317 = sand.u32 %s27, 1
        %s318 = scalar_lea.sflag [#allocation6], %s317
        %s319 = sand.u32 %s61, 1
        %s320 = smul.addr %s319, 128
        %s321 = scalar_lea.vmem [#allocation5], %s320
        %p322 = pneg %p74
        %p323 = pneg %p71
        %p324 = pneg %p95
        %p325 = pneg %p92
        %p326 = pneg %p116
        %p327 = pneg %p113
        %p328 = pneg %p137
        %p329 = pneg %p134
        %p330 = pneg %p158
        %p331 = pneg %p155
        %p332 = pneg %p184
        %p333 = pneg %p181
        %s334 = sand.u32 %s171, 1
        %s335 = scalar_lea.sflag [#allocation4], %s334
        %s336 = sand.u32 %s171, 1
        %s337 = smul.addr %s336, 128
        %s338 = scalar_lea.vmem [#allocation10], %s337
        %s339 = smul.u32 16, %s27
        %s340 = smul.u32 16, %s27
        %s341 = smul.u32 16, %s27
        %v342 = vld [vmem:[%s288] sm:$0xff]
        %v343 = vld [vmem:[%s288 + $0x8] sm:$0xff]
        %v344 = vld [vmem:[%s288 + $0x10] sm:$0xff]
        %v345 = vld [vmem:[%s288 + $0x18] sm:$0xff]
        %v346 = vld [vmem:[%s288 + $0x20] sm:$0xff]
        %v347 = vld [vmem:[%s288 + $0x28] sm:$0xff]
        %v348 = vld [vmem:[%s288 + $0x30] sm:$0xff]
        %v349 = vld [vmem:[%s288 + $0x38] sm:$0xff]
        %v350 = vld [vmem:[%s288 + $0x40] sm:$0xff]
        %v351 = vld [vmem:[%s288 + $0x48] sm:$0xff]
        %v352 = vld [vmem:[%s288 + $0x50] sm:$0xff]
        %v353 = vld [vmem:[%s288 + $0x58] sm:$0xff]
        %v354 = vld [vmem:[%s288 + $0x60] sm:$0xff]
        %v355 = vld [vmem:[%s288 + $0x68] sm:$0xff]
        %v356 = vld [vmem:[%s288 + $0x70] sm:$0xff]
        %v357 = vld [vmem:[%s288 + $0x78] sm:$0xff]
        %v358 = vld [vmem:[%s297] sm:$0xff]
        %v359 = vld [vmem:[%s297 + $0x8] sm:$0xff]
        %v360 = vld [vmem:[%s297 + $0x10] sm:$0xff]
        %v361 = vld [vmem:[%s297 + $0x18] sm:$0xff]
        %v362 = vld [vmem:[%s297 + $0x20] sm:$0xff]
        %v363 = vld [vmem:[%s297 + $0x28] sm:$0xff]
        %v364 = vld [vmem:[%s297 + $0x30] sm:$0xff]
        %v365 = vld [vmem:[%s297 + $0x38] sm:$0xff]
        %v366 = vld [vmem:[%s297 + $0x40] sm:$0xff]
        %v367 = vld [vmem:[%s297 + $0x48] sm:$0xff]
        %v368 = vld [vmem:[%s297 + $0x50] sm:$0xff]
        %v369 = vld [vmem:[%s297 + $0x58] sm:$0xff]
        %v370 = vld [vmem:[%s297 + $0x60] sm:$0xff]
        %v371 = vld [vmem:[%s297 + $0x68] sm:$0xff]
        %v372 = vld [vmem:[%s297 + $0x70] sm:$0xff]
        %v373 = vld [vmem:[%s297 + $0x78] sm:$0xff]
        %v374 = vld [vmem:[#allocation7] sm:$0xff]
        %v375 = vld [vmem:[#allocation7 + $0x8] sm:$0xff]
        %v376 = vld [vmem:[#allocation7 + $0x10] sm:$0xff]
        %v377 = vld [vmem:[#allocation7 + $0x18] sm:$0xff]
        %v378 = vld [vmem:[#allocation7 + $0x20] sm:$0xff]
        %v379 = vld [vmem:[#allocation7 + $0x28] sm:$0xff]
        %v380 = vld [vmem:[#allocation7 + $0x30] sm:$0xff]
        %v381 = vld [vmem:[#allocation7 + $0x38] sm:$0xff]
        %v382 = vld [vmem:[#allocation7 + $0x40] sm:$0xff]
        %v383 = vld [vmem:[#allocation7 + $0x48] sm:$0xff]
        %v384 = vld [vmem:[#allocation7 + $0x50] sm:$0xff]
        %v385 = vld [vmem:[#allocation7 + $0x58] sm:$0xff]
        %v386 = vld [vmem:[#allocation7 + $0x60] sm:$0xff]
        %v387 = vld [vmem:[#allocation7 + $0x68] sm:$0xff]
        %v388 = vld [vmem:[#allocation7 + $0x70] sm:$0xff]
        %v389 = vld [vmem:[#allocation7 + $0x78] sm:$0xff]
        %v390 = vld [vmem:[#allocation7 + $0x80] sm:$0xff]
        %v391 = vld [vmem:[#allocation7 + $0x88] sm:$0xff]
        %v392 = vld [vmem:[#allocation7 + $0x90] sm:$0xff]
        %v393 = vld [vmem:[#allocation7 + $0x98] sm:$0xff]
        %v394 = vld [vmem:[#allocation7 + $0xa0] sm:$0xff]
        %v395 = vld [vmem:[#allocation7 + $0xa8] sm:$0xff]
        %v396 = vld [vmem:[#allocation7 + $0xb0] sm:$0xff]
        %v397 = vld [vmem:[#allocation7 + $0xb8] sm:$0xff]
        %v398 = vld [vmem:[#allocation7 + $0xc0] sm:$0xff]
        %v399 = vld [vmem:[#allocation7 + $0xc8] sm:$0xff]
        %v400 = vld [vmem:[#allocation7 + $0xd0] sm:$0xff]
        %v401 = vld [vmem:[#allocation7 + $0xd8] sm:$0xff]
        %v402 = vld [vmem:[#allocation7 + $0xe0] sm:$0xff]
        %v403 = vld [vmem:[#allocation7 + $0xe8] sm:$0xff]
        %v404 = vld [vmem:[#allocation7 + $0xf0] sm:$0xff]
        %v405 = vld [vmem:[#allocation7 + $0xf8] sm:$0xff]
        %v406 = vld [vmem:[#allocation7 + $0x100] sm:$0xff]
        %v407 = vld [vmem:[#allocation7 + $0x108] sm:$0xff]
        %v408 = vld [vmem:[#allocation7 + $0x110] sm:$0xff]
        %v409 = vld [vmem:[#allocation7 + $0x118] sm:$0xff]
        %v410 = vld [vmem:[#allocation7 + $0x120] sm:$0xff]
        %v411 = vld [vmem:[#allocation7 + $0x128] sm:$0xff]
        %v412 = vld [vmem:[#allocation7 + $0x130] sm:$0xff]
        %v413 = vld [vmem:[#allocation7 + $0x138] sm:$0xff]
        %v414 = vld [vmem:[#allocation7 + $0x140] sm:$0xff]
        %v415 = vld [vmem:[#allocation7 + $0x148] sm:$0xff]
        %v416 = vld [vmem:[#allocation7 + $0x150] sm:$0xff]
        %v417 = vld [vmem:[#allocation7 + $0x158] sm:$0xff]
        %v418 = vld [vmem:[#allocation7 + $0x160] sm:$0xff]
        %v419 = vld [vmem:[#allocation7 + $0x168] sm:$0xff]
        %v420 = vld [vmem:[#allocation7 + $0x170] sm:$0xff]
        %v421 = vld [vmem:[#allocation7 + $0x178] sm:$0xff]
        %v422 = vld [vmem:[%s4] sm:$0x7]
        %v424 = vlaneseq
        %v425 = vshrl.u32 %v424, 7
        %v426 = vsub.s32 0, %v425
        %v427 = vrot.slane %v422, %v426
        %v428 = vlaneseq
        %v429 = vshrl.u32 %v428, 7
        %v430 = vsub.s32 1, %v429
        %v431 = vrot.slane %v422, %v430
        %v432 = vlaneseq
        %v433 = vshrl.u32 %v432, 7
        %v434 = vsub.s32 2, %v433
        %v435 = vrot.slane %v422, %v434
        %439 = vmatprep.subr.mxu0 %v375
        %440 = vmatpush1.msra.mxu0 %v374
        %441 = vmatprep.subr.mxu0 %v378
        %442 = vmatpush1.msra.mxu0 %v377
        %443 = vmatprep.subr.mxu0 %v381
        %444 = vmatpush1.msra.mxu0 %v380
        %445 = vmatprep.subr.mxu0 %v384
        %446 = vmatpush1.msra.mxu0 %v383
        %447 = vmatprep.subr.mxu0 %v387
        %448 = vmatpush1.msra.mxu0 %v386
        %449 = vmatprep.subr.mxu0 %v390
        %450 = vmatpush1.msra.mxu0 %v389
        %451 = vmatprep.subr.mxu0 %v393
        %452 = vmatpush1.msra.mxu0 %v392
        %453 = vmatprep.subr.mxu0 %v396
        %454 = vmatpush1.msra.mxu0 %v395
        %455 = vmatprep.subr.mxu0 %v399
        %456 = vmatpush1.msra.mxu0 %v398
        %457 = vmatprep.subr.mxu0 %v402
        %458 = vmatpush1.msra.mxu0 %v401
        %459 = vmatprep.subr.mxu0 %v405
        %460 = vmatpush1.msra.mxu0 %v404
        %461 = vmatprep.subr.mxu0 %v408
        %462 = vmatpush1.msra.mxu0 %v407
        %463 = vmatprep.subr.mxu0 %v411
        %464 = vmatpush1.msra.mxu0 %v410
        %465 = vmatprep.subr.mxu0 %v414
        %466 = vmatpush1.msra.mxu0 %v413
        %467 = vmatprep.subr.mxu0 %v417
        %468 = vmatpush1.msra.mxu0 %v416
        %469 = vmatprep.subr.mxu0 %v420
        %470 = vmatpush1.msra.mxu0 %v419
        %471 = vmatprep.subr.mxu0 0.0
        %472 = vmatpush1.msra.mxu0 0.0
        %473 = vmatprep.subr.mxu0 0.0
        %474 = vmatpush1.msra.mxu0 0.0
        %475 = vmatprep.subr.mxu0 0.0
        %476 = vmatpush1.msra.mxu0 0.0
        %477 = vmatprep.subr.mxu0 0.0
        %478 = vmatpush1.msra.mxu0 0.0
        %479 = vmatprep.subr.mxu0 0.0
        %480 = vmatpush1.msra.mxu0 0.0
        %481 = vmatprep.subr.mxu0 0.0
        %482 = vmatpush1.msra.mxu0 0.0
        %483 = vmatprep.subr.mxu0 0.0
        %484 = vmatpush1.msra.mxu0 0.0
        %485 = vmatprep.subr.mxu0 0.0
        %486 = vmatpush1.msra.mxu0 0.0
        %487 = vmatprep.subr.mxu0 0.0
        %488 = vmatpush1.msra.mxu0 0.0
        %489 = vmatprep.subr.mxu0 0.0
        %490 = vmatpush1.msra.mxu0 0.0
        %491 = vmatprep.subr.mxu0 0.0
        %492 = vmatpush1.msra.mxu0 0.0
        %493 = vmatprep.subr.mxu0 0.0
        %494 = vmatpush1.msra.mxu0 0.0
        %495 = vmatprep.subr.mxu0 0.0
        %496 = vmatpush1.msra.mxu0 0.0
        %497 = vmatprep.subr.mxu0 0.0
        %498 = vmatpush1.msra.mxu0 0.0
        %499 = vmatprep.subr.mxu0 0.0
        %500 = vmatpush1.msra.mxu0 0.0
        %501 = vmatprep.subr.mxu0 0.0
        %502 = vmatpush1.msra.mxu0 0.0
        %503 = vmatprep.mubr.f32.mxu0 0.0
        %504 = vmatmul.mubr.f32.gmra.mrb[0].mxu0 %v342
        %v505 = vpop.f32.mrb[0].mxu0
        %v506 = vadd.f32 %v427, %v505
        %v507 = vpop.f32.mrb[0].mxu0
        %v508 = vadd.f32 %v431, %v507
        %509 = vmatprep.mubr.f32.mxu0 0.0
        %510 = vmatmul.mubr.f32.gmra.mrb[0].mxu0 %v343
        %v511 = vpop.f32.mrb[0].mxu0
        %v512 = vadd.f32 %v427, %v511
        %v513 = vpop.f32.mrb[0].mxu0
        %v514 = vadd.f32 %v431, %v513
        %515 = vmatprep.mubr.f32.mxu0 0.0
        %516 = vmatmul.mubr.f32.gmra.mrb[0].mxu0 %v344
        %v517 = vpop.f32.mrb[0].mxu0
        %v518 = vadd.f32 %v427, %v517
        %v519 = vpop.f32.mrb[0].mxu0
        %v520 = vadd.f32 %v431, %v519
        %521 = vmatprep.mubr.f32.mxu0 0.0
        %522 = vmatmul.mubr.f32.gmra.mrb[0].mxu0 %v345
        %v523 = vpop.f32.mrb[0].mxu0
        %v524 = vadd.f32 %v427, %v523
        %v525 = vpop.f32.mrb[0].mxu0
        %v526 = vadd.f32 %v431, %v525
        %527 = vmatprep.mubr.f32.mxu0 0.0
        %528 = vmatmul.mubr.f32.gmra.mrb[0].mxu0 %v346
        %v529 = vpop.f32.mrb[0].mxu0
        %v530 = vadd.f32 %v427, %v529
        %v531 = vpop.f32.mrb[0].mxu0
        %v532 = vadd.f32 %v431, %v531
        %533 = vmatprep.mubr.f32.mxu0 0.0
        %534 = vmatmul.mubr.f32.gmra.mrb[0].mxu0 %v347
        %v535 = vpop.f32.mrb[0].mxu0
        %v536 = vadd.f32 %v427, %v535
        %v537 = vpop.f32.mrb[0].mxu0
        %v538 = vadd.f32 %v431, %v537
        %539 = vmatprep.mubr.f32.mxu0 0.0
        %540 = vmatmul.mubr.f32.gmra.mrb[0].mxu0 %v348
        %v541 = vpop.f32.mrb[0].mxu0
        %v542 = vadd.f32 %v427, %v541
        %v543 = vpop.f32.mrb[0].mxu0
        %v544 = vadd.f32 %v431, %v543
        %545 = vmatprep.mubr.f32.mxu0 0.0
        %546 = vmatmul.mubr.f32.gmra.mrb[0].mxu0 %v349
        %v547 = vpop.f32.mrb[0].mxu0
        %v548 = vadd.f32 %v427, %v547
        %v549 = vpop.f32.mrb[0].mxu0
        %v550 = vadd.f32 %v431, %v549
        %551 = vmatprep.mubr.f32.mxu0 0.0
        %552 = vmatmul.mubr.f32.gmra.mrb[0].mxu0 %v350
        %v553 = vpop.f32.mrb[0].mxu0
        %v554 = vadd.f32 %v427, %v553
        %v555 = vpop.f32.mrb[0].mxu0
        %v556 = vadd.f32 %v431, %v555
        %557 = vmatprep.mubr.f32.mxu0 0.0
        %558 = vmatmul.mubr.f32.gmra.mrb[0].mxu0 %v351
        %v559 = vpop.f32.mrb[0].mxu0
        %v560 = vadd.f32 %v427, %v559
        %v561 = vpop.f32.mrb[0].mxu0
        %v562 = vadd.f32 %v431, %v561
        %563 = vmatprep.mubr.f32.mxu0 0.0
        %564 = vmatmul.mubr.f32.gmra.mrb[0].mxu0 %v352
        %v565 = vpop.f32.mrb[0].mxu0
        %v566 = vadd.f32 %v427, %v565
        %v567 = vpop.f32.mrb[0].mxu0
        %v568 = vadd.f32 %v431, %v567
        %569 = vmatprep.mubr.f32.mxu0 0.0
        %570 = vmatmul.mubr.f32.gmra.mrb[0].mxu0 %v353
        %v571 = vpop.f32.mrb[0].mxu0
        %v572 = vadd.f32 %v427, %v571
        %v573 = vpop.f32.mrb[0].mxu0
        %v574 = vadd.f32 %v431, %v573
        %575 = vmatprep.mubr.f32.mxu0 0.0
        %576 = vmatmul.mubr.f32.gmra.mrb[0].mxu0 %v354
        %v577 = vpop.f32.mrb[0].mxu0
        %v578 = vadd.f32 %v427, %v577
        %v579 = vpop.f32.mrb[0].mxu0
        %v580 = vadd.f32 %v431, %v579
        %581 = vmatprep.mubr.f32.mxu0 0.0
        %582 = vmatmul.mubr.f32.gmra.mrb[0].mxu0 %v355
        %v583 = vpop.f32.mrb[0].mxu0
        %v584 = vadd.f32 %v427, %v583
        %v585 = vpop.f32.mrb[0].mxu0
        %v586 = vadd.f32 %v431, %v585
        %587 = vmatprep.mubr.f32.mxu0 0.0
        %588 = vmatmul.mubr.f32.gmra.mrb[0].mxu0 %v356
        %v589 = vpop.f32.mrb[0].mxu0
        %v590 = vadd.f32 %v427, %v589
        %v591 = vpop.f32.mrb[0].mxu0
        %v592 = vadd.f32 %v431, %v591
        %593 = vmatprep.mubr.f32.mxu0 0.0
        %594 = vmatmul.mubr.f32.gmra.mrb[0].mxu0 %v357
        %v595 = vpop.f32.mrb[0].mxu0
        %v596 = vadd.f32 %v427, %v595
        %v597 = vpop.f32.mrb[0].mxu0
        %v598 = vadd.f32 %v431, %v597
        %599 = vdwg.mxu0
        %600 = vmatprep.subr.mxu0 0.0
        %601 = vmatpush1.msra.mxu0 %v376
        %602 = vmatprep.subr.mxu0 0.0
        %603 = vmatpush1.msra.mxu0 %v379
        %604 = vmatprep.subr.mxu0 0.0
        %605 = vmatpush1.msra.mxu0 %v382
        %606 = vmatprep.subr.mxu0 0.0
        %607 = vmatpush1.msra.mxu0 %v385
        %608 = vmatprep.subr.mxu0 0.0
        %609 = vmatpush1.msra.mxu0 %v388
        %610 = vmatprep.subr.mxu0 0.0
        %611 = vmatpush1.msra.mxu0 %v391
        %612 = vmatprep.subr.mxu0 0.0
        %613 = vmatpush1.msra.mxu0 %v394
        %614 = vmatprep.subr.mxu0 0.0
        %615 = vmatpush1.msra.mxu0 %v397
        %616 = vmatprep.subr.mxu0 0.0
        %617 = vmatpush1.msra.mxu0 %v400
        %618 = vmatprep.subr.mxu0 0.0
        %619 = vmatpush1.msra.mxu0 %v403
        %620 = vmatprep.subr.mxu0 0.0
        %621 = vmatpush1.msra.mxu0 %v406
        %622 = vmatprep.subr.mxu0 0.0
        %623 = vmatpush1.msra.mxu0 %v409
        %624 = vmatprep.subr.mxu0 0.0
        %625 = vmatpush1.msra.mxu0 %v412
        %626 = vmatprep.subr.mxu0 0.0
        %627 = vmatpush1.msra.mxu0 %v415
        %628 = vmatprep.subr.mxu0 0.0
        %629 = vmatpush1.msra.mxu0 %v418
        %630 = vmatprep.subr.mxu0 0.0
        %631 = vmatpush1.msra.mxu0 %v421
        %632 = vmatprep.subr.mxu0 0.0
        %633 = vmatpush1.msra.mxu0 0.0
        %634 = vmatprep.subr.mxu0 0.0
        %635 = vmatpush1.msra.mxu0 0.0
        %636 = vmatprep.subr.mxu0 0.0
        %637 = vmatpush1.msra.mxu0 0.0
        %638 = vmatprep.subr.mxu0 0.0
        %639 = vmatpush1.msra.mxu0 0.0
        %640 = vmatprep.subr.mxu0 0.0
        %641 = vmatpush1.msra.mxu0 0.0
        %642 = vmatprep.subr.mxu0 0.0
        %643 = vmatpush1.msra.mxu0 0.0
        %644 = vmatprep.subr.mxu0 0.0
        %645 = vmatpush1.msra.mxu0 0.0
        %646 = vmatprep.subr.mxu0 0.0
        %647 = vmatpush1.msra.mxu0 0.0
        %648 = vmatprep.subr.mxu0 0.0
        %649 = vmatpush1.msra.mxu0 0.0
        %650 = vmatprep.subr.mxu0 0.0
        %651 = vmatpush1.msra.mxu0 0.0
        %652 = vmatprep.subr.mxu0 0.0
        %653 = vmatpush1.msra.mxu0 0.0
        %654 = vmatprep.subr.mxu0 0.0
        %655 = vmatpush1.msra.mxu0 0.0
        %656 = vmatprep.subr.mxu0 0.0
        %657 = vmatpush1.msra.mxu0 0.0
        %658 = vmatprep.subr.mxu0 0.0
        %659 = vmatpush1.msra.mxu0 0.0
        %660 = vmatprep.subr.mxu0 0.0
        %661 = vmatpush1.msra.mxu0 0.0
        %662 = vmatprep.subr.mxu0 0.0
        %663 = vmatpush1.msra.mxu0 0.0
        %664 = vmatprep.mubr.f32.mxu0 0.0
        %665 = vmatmul.mubr.f32.gmra.mrb[0].mxu0 %v342
        %v666 = vpop.f32.mrb[0].mxu0
        %v667 = vadd.f32 %v435, %v666
        %v668 = vpop.f32.mrb[0].mxu0
        %669 = vmatprep.mubr.f32.mxu0 0.0
        %670 = vmatmul.mubr.f32.gmra.mrb[0].mxu0 %v343
        %v671 = vpop.f32.mrb[0].mxu0
        %v672 = vadd.f32 %v435, %v671
        %v673 = vpop.f32.mrb[0].mxu0
        %674 = vmatprep.mubr.f32.mxu0 0.0
        %675 = vmatmul.mubr.f32.gmra.mrb[0].mxu0 %v344
        %v676 = vpop.f32.mrb[0].mxu0
        %v677 = vadd.f32 %v435, %v676
        %v678 = vpop.f32.mrb[0].mxu0
        %679 = vmatprep.mubr.f32.mxu0 0.0
        %680 = vmatmul.mubr.f32.gmra.mrb[0].mxu0 %v345
        %v681 = vpop.f32.mrb[0].mxu0
        %v682 = vadd.f32 %v435, %v681
        %v683 = vpop.f32.mrb[0].mxu0
        %684 = vmatprep.mubr.f32.mxu0 0.0
        %685 = vmatmul.mubr.f32.gmra.mrb[0].mxu0 %v346
        %v686 = vpop.f32.mrb[0].mxu0
        %v687 = vadd.f32 %v435, %v686
        %v688 = vpop.f32.mrb[0].mxu0
        %689 = vmatprep.mubr.f32.mxu0 0.0
        %690 = vmatmul.mubr.f32.gmra.mrb[0].mxu0 %v347
        %v691 = vpop.f32.mrb[0].mxu0
        %v692 = vadd.f32 %v435, %v691
        %v693 = vpop.f32.mrb[0].mxu0
        %694 = vmatprep.mubr.f32.mxu0 0.0
        %695 = vmatmul.mubr.f32.gmra.mrb[0].mxu0 %v348
        %v696 = vpop.f32.mrb[0].mxu0
        %v697 = vadd.f32 %v435, %v696
        %v698 = vpop.f32.mrb[0].mxu0
        %699 = vmatprep.mubr.f32.mxu0 0.0
        %700 = vmatmul.mubr.f32.gmra.mrb[0].mxu0 %v349
        %v701 = vpop.f32.mrb[0].mxu0
        %v702 = vadd.f32 %v435, %v701
        %v703 = vpop.f32.mrb[0].mxu0
        %704 = vmatprep.mubr.f32.mxu0 0.0
        %705 = vmatmul.mubr.f32.gmra.mrb[0].mxu0 %v350
        %v706 = vpop.f32.mrb[0].mxu0
        %v707 = vadd.f32 %v435, %v706
        %v708 = vpop.f32.mrb[0].mxu0
        %709 = vmatprep.mubr.f32.mxu0 0.0
        %710 = vmatmul.mubr.f32.gmra.mrb[0].mxu0 %v351
        %v711 = vpop.f32.mrb[0].mxu0
        %v712 = vadd.f32 %v435, %v711
        %v713 = vpop.f32.mrb[0].mxu0
        %714 = vmatprep.mubr.f32.mxu0 0.0
        %715 = vmatmul.mubr.f32.gmra.mrb[0].mxu0 %v352
        %v716 = vpop.f32.mrb[0].mxu0
        %v717 = vadd.f32 %v435, %v716
        %v718 = vpop.f32.mrb[0].mxu0
        %719 = vmatprep.mubr.f32.mxu0 0.0
        %720 = vmatmul.mubr.f32.gmra.mrb[0].mxu0 %v353
        %v721 = vpop.f32.mrb[0].mxu0
        %v722 = vadd.f32 %v435, %v721
        %v723 = vpop.f32.mrb[0].mxu0
        %724 = vmatprep.mubr.f32.mxu0 0.0
        %725 = vmatmul.mubr.f32.gmra.mrb[0].mxu0 %v354
        %v726 = vpop.f32.mrb[0].mxu0
        %v727 = vadd.f32 %v435, %v726
        %v728 = vpop.f32.mrb[0].mxu0
        %729 = vmatprep.mubr.f32.mxu0 0.0
        %730 = vmatmul.mubr.f32.gmra.mrb[0].mxu0 %v355
        %v731 = vpop.f32.mrb[0].mxu0
        %v732 = vadd.f32 %v435, %v731
        %v733 = vpop.f32.mrb[0].mxu0
        %734 = vmatprep.mubr.f32.mxu0 0.0
        %735 = vmatmul.mubr.f32.gmra.mrb[0].mxu0 %v356
        %v736 = vpop.f32.mrb[0].mxu0
        %v737 = vadd.f32 %v435, %v736
        %v738 = vpop.f32.mrb[0].mxu0
        %739 = vmatprep.mubr.f32.mxu0 0.0
        %740 = vmatmul.mubr.f32.gmra.mrb[0].mxu0 %v357
        %v741 = vpop.f32.mrb[0].mxu0
        %v742 = vadd.f32 %v435, %v741
        %v743 = vpop.f32.mrb[0].mxu0
        %744 = vdwg.mxu0
        %v745 = vld [vmem:[#allocation8] sm:$0xff]
        %v746 = vld [vmem:[#allocation8 + $0x8] sm:$0xff]
        %v747 = vld [vmem:[#allocation8 + $0x10] sm:$0xff]
        %v748 = vld [vmem:[#allocation8 + $0x18] sm:$0xff]
        %v749 = vld [vmem:[#allocation8 + $0x20] sm:$0xff]
        %v750 = vld [vmem:[#allocation8 + $0x28] sm:$0xff]
        %v751 = vld [vmem:[#allocation8 + $0x30] sm:$0xff]
        %v752 = vld [vmem:[#allocation8 + $0x38] sm:$0xff]
        %v753 = vld [vmem:[#allocation8 + $0x40] sm:$0xff]
        %v754 = vld [vmem:[#allocation8 + $0x48] sm:$0xff]
        %v755 = vld [vmem:[#allocation8 + $0x50] sm:$0xff]
        %v756 = vld [vmem:[#allocation8 + $0x58] sm:$0xff]
        %v757 = vld [vmem:[#allocation8 + $0x60] sm:$0xff]
        %v758 = vld [vmem:[#allocation8 + $0x68] sm:$0xff]
        %v759 = vld [vmem:[#allocation8 + $0x70] sm:$0xff]
        %v760 = vld [vmem:[#allocation8 + $0x78] sm:$0xff]
        %v761 = vld [vmem:[#allocation8 + $0x80] sm:$0xff]
        %v762 = vld [vmem:[#allocation8 + $0x88] sm:$0xff]
        %v763 = vld [vmem:[#allocation8 + $0x90] sm:$0xff]
        %v764 = vld [vmem:[#allocation8 + $0x98] sm:$0xff]
        %v765 = vld [vmem:[#allocation8 + $0xa0] sm:$0xff]
        %v766 = vld [vmem:[#allocation8 + $0xa8] sm:$0xff]
        %v767 = vld [vmem:[#allocation8 + $0xb0] sm:$0xff]
        %v768 = vld [vmem:[#allocation8 + $0xb8] sm:$0xff]
        %v769 = vld [vmem:[#allocation8 + $0xc0] sm:$0xff]
        %v770 = vld [vmem:[#allocation8 + $0xc8] sm:$0xff]
        %v771 = vld [vmem:[#allocation8 + $0xd0] sm:$0xff]
        %v772 = vld [vmem:[#allocation8 + $0xd8] sm:$0xff]
        %v773 = vld [vmem:[#allocation8 + $0xe0] sm:$0xff]
        %v774 = vld [vmem:[#allocation8 + $0xe8] sm:$0xff]
        %v775 = vld [vmem:[#allocation8 + $0xf0] sm:$0xff]
        %v776 = vld [vmem:[#allocation8 + $0xf8] sm:$0xff]
        %v777 = vld [vmem:[#allocation8 + $0x100] sm:$0xff]
        %v778 = vld [vmem:[#allocation8 + $0x108] sm:$0xff]
        %v779 = vld [vmem:[#allocation8 + $0x110] sm:$0xff]
        %v780 = vld [vmem:[#allocation8 + $0x118] sm:$0xff]
        %v781 = vld [vmem:[#allocation8 + $0x120] sm:$0xff]
        %v782 = vld [vmem:[#allocation8 + $0x128] sm:$0xff]
        %v783 = vld [vmem:[#allocation8 + $0x130] sm:$0xff]
        %v784 = vld [vmem:[#allocation8 + $0x138] sm:$0xff]
        %v785 = vld [vmem:[#allocation8 + $0x140] sm:$0xff]
        %v786 = vld [vmem:[#allocation8 + $0x148] sm:$0xff]
        %v787 = vld [vmem:[#allocation8 + $0x150] sm:$0xff]
        %v788 = vld [vmem:[#allocation8 + $0x158] sm:$0xff]
        %v789 = vld [vmem:[#allocation8 + $0x160] sm:$0xff]
        %v790 = vld [vmem:[#allocation8 + $0x168] sm:$0xff]
        %v791 = vld [vmem:[#allocation8 + $0x170] sm:$0xff]
        %v792 = vld [vmem:[#allocation8 + $0x178] sm:$0xff]
        %v793 = vld [vmem:[%s5] sm:$0x7]
        %v795 = vlaneseq
        %v796 = vshrl.u32 %v795, 7
        %v797 = vsub.s32 0, %v796
        %v798 = vrot.slane %v793, %v797
        %v799 = vlaneseq
        %v800 = vshrl.u32 %v799, 7
        %v801 = vsub.s32 1, %v800
        %v802 = vrot.slane %v793, %v801
        %v803 = vlaneseq
        %v804 = vshrl.u32 %v803, 7
        %v805 = vsub.s32 2, %v804
        %v806 = vrot.slane %v793, %v805
        %810 = vmatprep.subr.mxu0 %v746
        %811 = vmatpush1.msra.mxu0 %v745
        %812 = vmatprep.subr.mxu0 %v749
        %813 = vmatpush1.msra.mxu0 %v748
        %814 = vmatprep.subr.mxu0 %v752
        %815 = vmatpush1.msra.mxu0 %v751
        %816 = vmatprep.subr.mxu0 %v755
        %817 = vmatpush1.msra.mxu0 %v754
        %818 = vmatprep.subr.mxu0 %v758
        %819 = vmatpush1.msra.mxu0 %v757
        %820 = vmatprep.subr.mxu0 %v761
        %821 = vmatpush1.msra.mxu0 %v760
        %822 = vmatprep.subr.mxu0 %v764
        %823 = vmatpush1.msra.mxu0 %v763
        %824 = vmatprep.subr.mxu0 %v767
        %825 = vmatpush1.msra.mxu0 %v766
        %826 = vmatprep.subr.mxu0 %v770
        %827 = vmatpush1.msra.mxu0 %v769
        %828 = vmatprep.subr.mxu0 %v773
        %829 = vmatpush1.msra.mxu0 %v772
        %830 = vmatprep.subr.mxu0 %v776
        %831 = vmatpush1.msra.mxu0 %v775
        %832 = vmatprep.subr.mxu0 %v779
        %833 = vmatpush1.msra.mxu0 %v778
        %834 = vmatprep.subr.mxu0 %v782
        %835 = vmatpush1.msra.mxu0 %v781
        %836 = vmatprep.subr.mxu0 %v785
        %837 = vmatpush1.msra.mxu0 %v784
        %838 = vmatprep.subr.mxu0 %v788
        %839 = vmatpush1.msra.mxu0 %v787
        %840 = vmatprep.subr.mxu0 %v791
        %841 = vmatpush1.msra.mxu0 %v790
        %842 = vmatprep.subr.mxu0 0.0
        %843 = vmatpush1.msra.mxu0 0.0
        %844 = vmatprep.subr.mxu0 0.0
        %845 = vmatpush1.msra.mxu0 0.0
        %846 = vmatprep.subr.mxu0 0.0
        %847 = vmatpush1.msra.mxu0 0.0
        %848 = vmatprep.subr.mxu0 0.0
        %849 = vmatpush1.msra.mxu0 0.0
        %850 = vmatprep.subr.mxu0 0.0
        %851 = vmatpush1.msra.mxu0 0.0
        %852 = vmatprep.subr.mxu0 0.0
        %853 = vmatpush1.msra.mxu0 0.0
        %854 = vmatprep.subr.mxu0 0.0
        %855 = vmatpush1.msra.mxu0 0.0
        %856 = vmatprep.subr.mxu0 0.0
        %857 = vmatpush1.msra.mxu0 0.0
        %858 = vmatprep.subr.mxu0 0.0
        %859 = vmatpush1.msra.mxu0 0.0
        %860 = vmatprep.subr.mxu0 0.0
        %861 = vmatpush1.msra.mxu0 0.0
        %862 = vmatprep.subr.mxu0 0.0
        %863 = vmatpush1.msra.mxu0 0.0
        %864 = vmatprep.subr.mxu0 0.0
        %865 = vmatpush1.msra.mxu0 0.0
        %866 = vmatprep.subr.mxu0 0.0
        %867 = vmatpush1.msra.mxu0 0.0
        %868 = vmatprep.subr.mxu0 0.0
        %869 = vmatpush1.msra.mxu0 0.0
        %870 = vmatprep.subr.mxu0 0.0
        %871 = vmatpush1.msra.mxu0 0.0
        %872 = vmatprep.subr.mxu0 0.0
        %873 = vmatpush1.msra.mxu0 0.0
        %874 = vmatprep.mubr.f32.mxu0 0.0
        %875 = vmatmul.mubr.f32.gmra.mrb[0].mxu0 %v358
        %v876 = vpop.f32.mrb[0].mxu0
        %v877 = vadd.f32 %v798, %v876
        %v878 = vpop.f32.mrb[0].mxu0
        %v879 = vadd.f32 %v802, %v878
        %880 = vmatprep.mubr.f32.mxu0 0.0
        %881 = vmatmul.mubr.f32.gmra.mrb[0].mxu0 %v359
        %v882 = vpop.f32.mrb[0].mxu0
        %v883 = vadd.f32 %v798, %v882
        %v884 = vpop.f32.mrb[0].mxu0
        %v885 = vadd.f32 %v802, %v884
        %886 = vmatprep.mubr.f32.mxu0 0.0
        %887 = vmatmul.mubr.f32.gmra.mrb[0].mxu0 %v360
        %v888 = vpop.f32.mrb[0].mxu0
        %v889 = vadd.f32 %v798, %v888
        %v890 = vpop.f32.mrb[0].mxu0
        %v891 = vadd.f32 %v802, %v890
        %892 = vmatprep.mubr.f32.mxu0 0.0
        %893 = vmatmul.mubr.f32.gmra.mrb[0].mxu0 %v361
        %v894 = vpop.f32.mrb[0].mxu0
        %v895 = vadd.f32 %v798, %v894
        %v896 = vpop.f32.mrb[0].mxu0
        %v897 = vadd.f32 %v802, %v896
        %898 = vmatprep.mubr.f32.mxu0 0.0
        %899 = vmatmul.mubr.f32.gmra.mrb[0].mxu0 %v362
        %v900 = vpop.f32.mrb[0].mxu0
        %v901 = vadd.f32 %v798, %v900
        %v902 = vpop.f32.mrb[0].mxu0
        %v903 = vadd.f32 %v802, %v902
        %904 = vmatprep.mubr.f32.mxu0 0.0
        %905 = vmatmul.mubr.f32.gmra.mrb[0].mxu0 %v363
        %v906 = vpop.f32.mrb[0].mxu0
        %v907 = vadd.f32 %v798, %v906
        %v908 = vpop.f32.mrb[0].mxu0
        %v909 = vadd.f32 %v802, %v908
        %910 = vmatprep.mubr.f32.mxu0 0.0
        %911 = vmatmul.mubr.f32.gmra.mrb[0].mxu0 %v364
        %v912 = vpop.f32.mrb[0].mxu0
        %v913 = vadd.f32 %v798, %v912
        %v914 = vpop.f32.mrb[0].mxu0
        %v915 = vadd.f32 %v802, %v914
        %916 = vmatprep.mubr.f32.mxu0 0.0
        %917 = vmatmul.mubr.f32.gmra.mrb[0].mxu0 %v365
        %v918 = vpop.f32.mrb[0].mxu0
        %v919 = vadd.f32 %v798, %v918
        %v920 = vpop.f32.mrb[0].mxu0
        %v921 = vadd.f32 %v802, %v920
        %922 = vmatprep.mubr.f32.mxu0 0.0
        %923 = vmatmul.mubr.f32.gmra.mrb[0].mxu0 %v366
        %v924 = vpop.f32.mrb[0].mxu0
        %v925 = vadd.f32 %v798, %v924
        %v926 = vpop.f32.mrb[0].mxu0
        %v927 = vadd.f32 %v802, %v926
        %928 = vmatprep.mubr.f32.mxu0 0.0
        %929 = vmatmul.mubr.f32.gmra.mrb[0].mxu0 %v367
        %v930 = vpop.f32.mrb[0].mxu0
        %v931 = vadd.f32 %v798, %v930
        %v932 = vpop.f32.mrb[0].mxu0
        %v933 = vadd.f32 %v802, %v932
        %934 = vmatprep.mubr.f32.mxu0 0.0
        %935 = vmatmul.mubr.f32.gmra.mrb[0].mxu0 %v368
        %v936 = vpop.f32.mrb[0].mxu0
        %v937 = vadd.f32 %v798, %v936
        %v938 = vpop.f32.mrb[0].mxu0
        %v939 = vadd.f32 %v802, %v938
        %940 = vmatprep.mubr.f32.mxu0 0.0
        %941 = vmatmul.mubr.f32.gmra.mrb[0].mxu0 %v369
        %v942 = vpop.f32.mrb[0].mxu0
        %v943 = vadd.f32 %v798, %v942
        %v944 = vpop.f32.mrb[0].mxu0
        %v945 = vadd.f32 %v802, %v944
        %946 = vmatprep.mubr.f32.mxu0 0.0
        %947 = vmatmul.mubr.f32.gmra.mrb[0].mxu0 %v370
        %v948 = vpop.f32.mrb[0].mxu0
        %v949 = vadd.f32 %v798, %v948
        %v950 = vpop.f32.mrb[0].mxu0
        %v951 = vadd.f32 %v802, %v950
        %952 = vmatprep.mubr.f32.mxu0 0.0
        %953 = vmatmul.mubr.f32.gmra.mrb[0].mxu0 %v371
        %v954 = vpop.f32.mrb[0].mxu0
        %v955 = vadd.f32 %v798, %v954
        %v956 = vpop.f32.mrb[0].mxu0
        %v957 = vadd.f32 %v802, %v956
        %958 = vmatprep.mubr.f32.mxu0 0.0
        %959 = vmatmul.mubr.f32.gmra.mrb[0].mxu0 %v372
        %v960 = vpop.f32.mrb[0].mxu0
        %v961 = vadd.f32 %v798, %v960
        %v962 = vpop.f32.mrb[0].mxu0
        %v963 = vadd.f32 %v802, %v962
        %964 = vmatprep.mubr.f32.mxu0 0.0
        %965 = vmatmul.mubr.f32.gmra.mrb[0].mxu0 %v373
        %v966 = vpop.f32.mrb[0].mxu0
        %v967 = vadd.f32 %v798, %v966
        %v968 = vpop.f32.mrb[0].mxu0
        %v969 = vadd.f32 %v802, %v968
        %970 = vdwg.mxu0
        %971 = vmatprep.subr.mxu0 0.0
        %972 = vmatpush1.msra.mxu0 %v747
        %973 = vmatprep.subr.mxu0 0.0
        %974 = vmatpush1.msra.mxu0 %v750
        %975 = vmatprep.subr.mxu0 0.0
        %976 = vmatpush1.msra.mxu0 %v753
        %977 = vmatprep.subr.mxu0 0.0
        %978 = vmatpush1.msra.mxu0 %v756
        %979 = vmatprep.subr.mxu0 0.0
        %980 = vmatpush1.msra.mxu0 %v759
        %981 = vmatprep.subr.mxu0 0.0
        %982 = vmatpush1.msra.mxu0 %v762
        %983 = vmatprep.subr.mxu0 0.0
        %984 = vmatpush1.msra.mxu0 %v765
        %985 = vmatprep.subr.mxu0 0.0
        %986 = vmatpush1.msra.mxu0 %v768
        %987 = vmatprep.subr.mxu0 0.0
        %988 = vmatpush1.msra.mxu0 %v771
        %989 = vmatprep.subr.mxu0 0.0
        %990 = vmatpush1.msra.mxu0 %v774
        %991 = vmatprep.subr.mxu0 0.0
        %992 = vmatpush1.msra.mxu0 %v777
        %993 = vmatprep.subr.mxu0 0.0
        %994 = vmatpush1.msra.mxu0 %v780
        %995 = vmatprep.subr.mxu0 0.0
        %996 = vmatpush1.msra.mxu0 %v783
        %997 = vmatprep.subr.mxu0 0.0
        %998 = vmatpush1.msra.mxu0 %v786
        %999 = vmatprep.subr.mxu0 0.0
        %1000 = vmatpush1.msra.mxu0 %v789
        %1001 = vmatprep.subr.mxu0 0.0
        %1002 = vmatpush1.msra.mxu0 %v792
        %1003 = vmatprep.subr.mxu0 0.0
        %1004 = vmatpush1.msra.mxu0 0.0
        %1005 = vmatprep.subr.mxu0 0.0
        %1006 = vmatpush1.msra.mxu0 0.0
        %1007 = vmatprep.subr.mxu0 0.0
        %1008 = vmatpush1.msra.mxu0 0.0
        %1009 = vmatprep.subr.mxu0 0.0
        %1010 = vmatpush1.msra.mxu0 0.0
        %1011 = vmatprep.subr.mxu0 0.0
        %1012 = vmatpush1.msra.mxu0 0.0
        %1013 = vmatprep.subr.mxu0 0.0
        %1014 = vmatpush1.msra.mxu0 0.0
        %1015 = vmatprep.subr.mxu0 0.0
        %1016 = vmatpush1.msra.mxu0 0.0
        %1017 = vmatprep.subr.mxu0 0.0
        %1018 = vmatpush1.msra.mxu0 0.0
        %1019 = vmatprep.subr.mxu0 0.0
        %1020 = vmatpush1.msra.mxu0 0.0
        %1021 = vmatprep.subr.mxu0 0.0
        %1022 = vmatpush1.msra.mxu0 0.0
        %1023 = vmatprep.subr.mxu0 0.0
        %1024 = vmatpush1.msra.mxu0 0.0
        %1025 = vmatprep.subr.mxu0 0.0
        %1026 = vmatpush1.msra.mxu0 0.0
        %1027 = vmatprep.subr.mxu0 0.0
        %1028 = vmatpush1.msra.mxu0 0.0
        %1029 = vmatprep.subr.mxu0 0.0
        %1030 = vmatpush1.msra.mxu0 0.0
        %1031 = vmatprep.subr.mxu0 0.0
        %1032 = vmatpush1.msra.mxu0 0.0
        %1033 = vmatprep.subr.mxu0 0.0
        %1034 = vmatpush1.msra.mxu0 0.0
        %1035 = vmatprep.mubr.f32.mxu0 0.0
        %1036 = vmatmul.mubr.f32.gmra.mrb[0].mxu0 %v358
        %v1037 = vpop.f32.mrb[0].mxu0
        %v1038 = vadd.f32 %v806, %v1037
        %v1039 = vpop.f32.mrb[0].mxu0
        %1040 = vmatprep.mubr.f32.mxu0 0.0
        %1041 = vmatmul.mubr.f32.gmra.mrb[0].mxu0 %v359
        %v1042 = vpop.f32.mrb[0].mxu0
        %v1043 = vadd.f32 %v806, %v1042
        %v1044 = vpop.f32.mrb[0].mxu0
        %1045 = vmatprep.mubr.f32.mxu0 0.0
        %1046 = vmatmul.mubr.f32.gmra.mrb[0].mxu0 %v360
        %v1047 = vpop.f32.mrb[0].mxu0
        %v1048 = vadd.f32 %v806, %v1047
        %v1049 = vpop.f32.mrb[0].mxu0
        %1050 = vmatprep.mubr.f32.mxu0 0.0
        %1051 = vmatmul.mubr.f32.gmra.mrb[0].mxu0 %v361
        %v1052 = vpop.f32.mrb[0].mxu0
        %v1053 = vadd.f32 %v806, %v1052
        %v1054 = vpop.f32.mrb[0].mxu0
        %1055 = vmatprep.mubr.f32.mxu0 0.0
        %1056 = vmatmul.mubr.f32.gmra.mrb[0].mxu0 %v362
        %v1057 = vpop.f32.mrb[0].mxu0
        %v1058 = vadd.f32 %v806, %v1057
        %v1059 = vpop.f32.mrb[0].mxu0
        %1060 = vmatprep.mubr.f32.mxu0 0.0
        %1061 = vmatmul.mubr.f32.gmra.mrb[0].mxu0 %v363
        %v1062 = vpop.f32.mrb[0].mxu0
        %v1063 = vadd.f32 %v806, %v1062
        %v1064 = vpop.f32.mrb[0].mxu0
        %1065 = vmatprep.mubr.f32.mxu0 0.0
        %1066 = vmatmul.mubr.f32.gmra.mrb[0].mxu0 %v364
        %v1067 = vpop.f32.mrb[0].mxu0
        %v1068 = vadd.f32 %v806, %v1067
        %v1069 = vpop.f32.mrb[0].mxu0
        %1070 = vmatprep.mubr.f32.mxu0 0.0
        %1071 = vmatmul.mubr.f32.gmra.mrb[0].mxu0 %v365
        %v1072 = vpop.f32.mrb[0].mxu0
        %v1073 = vadd.f32 %v806, %v1072
        %v1074 = vpop.f32.mrb[0].mxu0
        %1075 = vmatprep.mubr.f32.mxu0 0.0
        %1076 = vmatmul.mubr.f32.gmra.mrb[0].mxu0 %v366
        %v1077 = vpop.f32.mrb[0].mxu0
        %v1078 = vadd.f32 %v806, %v1077
        %v1079 = vpop.f32.mrb[0].mxu0
        %1080 = vmatprep.mubr.f32.mxu0 0.0
        %1081 = vmatmul.mubr.f32.gmra.mrb[0].mxu0 %v367
        %v1082 = vpop.f32.mrb[0].mxu0
        %v1083 = vadd.f32 %v806, %v1082
        %v1084 = vpop.f32.mrb[0].mxu0
        %1085 = vmatprep.mubr.f32.mxu0 0.0
        %1086 = vmatmul.mubr.f32.gmra.mrb[0].mxu0 %v368
        %v1087 = vpop.f32.mrb[0].mxu0
        %v1088 = vadd.f32 %v806, %v1087
        %v1089 = vpop.f32.mrb[0].mxu0
        %1090 = vmatprep.mubr.f32.mxu0 0.0
        %1091 = vmatmul.mubr.f32.gmra.mrb[0].mxu0 %v369
        %v1092 = vpop.f32.mrb[0].mxu0
        %v1093 = vadd.f32 %v806, %v1092
        %v1094 = vpop.f32.mrb[0].mxu0
        %1095 = vmatprep.mubr.f32.mxu0 0.0
        %1096 = vmatmul.mubr.f32.gmra.mrb[0].mxu0 %v370
        %v1097 = vpop.f32.mrb[0].mxu0
        %v1098 = vadd.f32 %v806, %v1097
        %v1099 = vpop.f32.mrb[0].mxu0
        %1100 = vmatprep.mubr.f32.mxu0 0.0
        %1101 = vmatmul.mubr.f32.gmra.mrb[0].mxu0 %v371
        %v1102 = vpop.f32.mrb[0].mxu0
        %v1103 = vadd.f32 %v806, %v1102
        %v1104 = vpop.f32.mrb[0].mxu0
        %1105 = vmatprep.mubr.f32.mxu0 0.0
        %1106 = vmatmul.mubr.f32.gmra.mrb[0].mxu0 %v372
        %v1107 = vpop.f32.mrb[0].mxu0
        %v1108 = vadd.f32 %v806, %v1107
        %v1109 = vpop.f32.mrb[0].mxu0
        %1110 = vmatprep.mubr.f32.mxu0 0.0
        %1111 = vmatmul.mubr.f32.gmra.mrb[0].mxu0 %v373
        %v1112 = vpop.f32.mrb[0].mxu0
        %v1113 = vadd.f32 %v806, %v1112
        %v1114 = vpop.f32.mrb[0].mxu0
        %1115 = vdwg.mxu0
        %v1116 = vadd.f32 %v506, %v877
        %v1117 = vadd.f32 %v512, %v883
        %v1118 = vadd.f32 %v518, %v889
        %v1119 = vadd.f32 %v524, %v895
        %v1120 = vadd.f32 %v530, %v901
        %v1121 = vadd.f32 %v536, %v907
        %v1122 = vadd.f32 %v542, %v913
        %v1123 = vadd.f32 %v548, %v919
        %v1124 = vadd.f32 %v554, %v925
        %v1125 = vadd.f32 %v560, %v931
        %v1126 = vadd.f32 %v566, %v937
        %v1127 = vadd.f32 %v572, %v943
        %v1128 = vadd.f32 %v578, %v949
        %v1129 = vadd.f32 %v584, %v955
        %v1130 = vadd.f32 %v590, %v961
        %v1131 = vadd.f32 %v596, %v967
        %v1132 = vxor.u32 %v1116, 2147483648
        %v1133 = vxor.u32 %v1117, 2147483648
        %v1134 = vxor.u32 %v1118, 2147483648
        %v1135 = vxor.u32 %v1119, 2147483648
        %v1136 = vxor.u32 %v1120, 2147483648
        %v1137 = vxor.u32 %v1121, 2147483648
        %v1138 = vxor.u32 %v1122, 2147483648
        %v1139 = vxor.u32 %v1123, 2147483648
        %v1140 = vxor.u32 %v1124, 2147483648
        %v1141 = vxor.u32 %v1125, 2147483648
        %v1142 = vxor.u32 %v1126, 2147483648
        %v1143 = vxor.u32 %v1127, 2147483648
        %v1144 = vxor.u32 %v1128, 2147483648
        %v1145 = vxor.u32 %v1129, 2147483648
        %v1146 = vxor.u32 %v1130, 2147483648
        %v1147 = vxor.u32 %v1131, 2147483648
        %v1148 = vmul.f32 %v1132, 1.442695
        %v1149 = vpow.pop %v1148
        %v1150 = vmul.f32 %v1133, 1.442695
        %v1151 = vpow.pop %v1150
        %v1152 = vmul.f32 %v1134, 1.442695
        %v1153 = vpow.pop %v1152
        %v1154 = vmul.f32 %v1135, 1.442695
        %v1155 = vpow.pop %v1154
        %v1156 = vmul.f32 %v1136, 1.442695
        %v1157 = vpow.pop %v1156
        %v1158 = vmul.f32 %v1137, 1.442695
        %v1159 = vpow.pop %v1158
        %v1160 = vmul.f32 %v1138, 1.442695
        %v1161 = vpow.pop %v1160
        %v1162 = vmul.f32 %v1139, 1.442695
        %v1163 = vpow.pop %v1162
        %v1164 = vmul.f32 %v1140, 1.442695
        %v1165 = vpow.pop %v1164
        %v1166 = vmul.f32 %v1141, 1.442695
        %v1167 = vpow.pop %v1166
        %v1168 = vmul.f32 %v1142, 1.442695
        %v1169 = vpow.pop %v1168
        %v1170 = vmul.f32 %v1143, 1.442695
        %v1171 = vpow.pop %v1170
        %v1172 = vmul.f32 %v1144, 1.442695
        %v1173 = vpow.pop %v1172
        %v1174 = vmul.f32 %v1145, 1.442695
        %v1175 = vpow.pop %v1174
        %v1176 = vmul.f32 %v1146, 1.442695
        %v1177 = vpow.pop %v1176
        %v1178 = vmul.f32 %v1147, 1.442695
        %v1179 = vpow.pop %v1178
        %v1180 = vadd.f32 %v1149, 1.0
        %v1181 = vadd.f32 %v1151, 1.0
        %v1182 = vadd.f32 %v1153, 1.0
        %v1183 = vadd.f32 %v1155, 1.0
        %v1184 = vadd.f32 %v1157, 1.0
        %v1185 = vadd.f32 %v1159, 1.0
        %v1186 = vadd.f32 %v1161, 1.0
        %v1187 = vadd.f32 %v1163, 1.0
        %v1188 = vadd.f32 %v1165, 1.0
        %v1189 = vadd.f32 %v1167, 1.0
        %v1190 = vadd.f32 %v1169, 1.0
        %v1191 = vadd.f32 %v1171, 1.0
        %v1192 = vadd.f32 %v1173, 1.0
        %v1193 = vadd.f32 %v1175, 1.0
        %v1194 = vadd.f32 %v1177, 1.0
        %v1195 = vadd.f32 %v1179, 1.0
        %v1196 = vrcp.pop %v1180
        %v1197 = vmul.f32 1.0, %v1196
        %v1198 = vrcp.pop %v1181
        %v1199 = vmul.f32 1.0, %v1198
        %v1200 = vrcp.pop %v1182
        %v1201 = vmul.f32 1.0, %v1200
        %v1202 = vrcp.pop %v1183
        %v1203 = vmul.f32 1.0, %v1202
        %v1204 = vrcp.pop %v1184
        %v1205 = vmul.f32 1.0, %v1204
        %v1206 = vrcp.pop %v1185
        %v1207 = vmul.f32 1.0, %v1206
        %v1208 = vrcp.pop %v1186
        %v1209 = vmul.f32 1.0, %v1208
        %v1210 = vrcp.pop %v1187
        %v1211 = vmul.f32 1.0, %v1210
        %v1212 = vrcp.pop %v1188
        %v1213 = vmul.f32 1.0, %v1212
        %v1214 = vrcp.pop %v1189
        %v1215 = vmul.f32 1.0, %v1214
        %v1216 = vrcp.pop %v1190
        %v1217 = vmul.f32 1.0, %v1216
        %v1218 = vrcp.pop %v1191
        %v1219 = vmul.f32 1.0, %v1218
        %v1220 = vrcp.pop %v1192
        %v1221 = vmul.f32 1.0, %v1220
        %v1222 = vrcp.pop %v1193
        %v1223 = vmul.f32 1.0, %v1222
        %v1224 = vrcp.pop %v1194
        %v1225 = vmul.f32 1.0, %v1224
        %v1226 = vrcp.pop %v1195
        %v1227 = vmul.f32 1.0, %v1226
        %v1228 = vadd.f32 %v508, %v879
        %v1229 = vadd.f32 %v514, %v885
        %v1230 = vadd.f32 %v520, %v891
        %v1231 = vadd.f32 %v526, %v897
        %v1232 = vadd.f32 %v532, %v903
        %v1233 = vadd.f32 %v538, %v909
        %v1234 = vadd.f32 %v544, %v915
        %v1235 = vadd.f32 %v550, %v921
        %v1236 = vadd.f32 %v556, %v927
        %v1237 = vadd.f32 %v562, %v933
        %v1238 = vadd.f32 %v568, %v939
        %v1239 = vadd.f32 %v574, %v945
        %v1240 = vadd.f32 %v580, %v951
        %v1241 = vadd.f32 %v586, %v957
        %v1242 = vadd.f32 %v592, %v963
        %v1243 = vadd.f32 %v598, %v969
        %v1244 = vxor.u32 %v1228, 2147483648
        %v1245 = vxor.u32 %v1229, 2147483648
        %v1246 = vxor.u32 %v1230, 2147483648
        %v1247 = vxor.u32 %v1231, 2147483648
        %v1248 = vxor.u32 %v1232, 2147483648
        %v1249 = vxor.u32 %v1233, 2147483648
        %v1250 = vxor.u32 %v1234, 2147483648
        %v1251 = vxor.u32 %v1235, 2147483648
        %v1252 = vxor.u32 %v1236, 2147483648
        %v1253 = vxor.u32 %v1237, 2147483648
        %v1254 = vxor.u32 %v1238, 2147483648
        %v1255 = vxor.u32 %v1239, 2147483648
        %v1256 = vxor.u32 %v1240, 2147483648
        %v1257 = vxor.u32 %v1241, 2147483648
        %v1258 = vxor.u32 %v1242, 2147483648
        %v1259 = vxor.u32 %v1243, 2147483648
        %v1260 = vmul.f32 %v1244, 1.442695
        %v1261 = vpow.pop %v1260
        %v1262 = vmul.f32 %v1245, 1.442695
        %v1263 = vpow.pop %v1262
        %v1264 = vmul.f32 %v1246, 1.442695
        %v1265 = vpow.pop %v1264
        %v1266 = vmul.f32 %v1247, 1.442695
        %v1267 = vpow.pop %v1266
        %v1268 = vmul.f32 %v1248, 1.442695
        %v1269 = vpow.pop %v1268
        %v1270 = vmul.f32 %v1249, 1.442695
        %v1271 = vpow.pop %v1270
        %v1272 = vmul.f32 %v1250, 1.442695
        %v1273 = vpow.pop %v1272
        %v1274 = vmul.f32 %v1251, 1.442695
        %v1275 = vpow.pop %v1274
        %v1276 = vmul.f32 %v1252, 1.442695
        %v1277 = vpow.pop %v1276
        %v1278 = vmul.f32 %v1253, 1.442695
        %v1279 = vpow.pop %v1278
        %v1280 = vmul.f32 %v1254, 1.442695
        %v1281 = vpow.pop %v1280
        %v1282 = vmul.f32 %v1255, 1.442695
        %v1283 = vpow.pop %v1282
        %v1284 = vmul.f32 %v1256, 1.442695
        %v1285 = vpow.pop %v1284
        %v1286 = vmul.f32 %v1257, 1.442695
        %v1287 = vpow.pop %v1286
        %v1288 = vmul.f32 %v1258, 1.442695
        %v1289 = vpow.pop %v1288
        %v1290 = vmul.f32 %v1259, 1.442695
        %v1291 = vpow.pop %v1290
        %v1292 = vadd.f32 %v1261, 1.0
        %v1293 = vadd.f32 %v1263, 1.0
        %v1294 = vadd.f32 %v1265, 1.0
        %v1295 = vadd.f32 %v1267, 1.0
        %v1296 = vadd.f32 %v1269, 1.0
        %v1297 = vadd.f32 %v1271, 1.0
        %v1298 = vadd.f32 %v1273, 1.0
        %v1299 = vadd.f32 %v1275, 1.0
        %v1300 = vadd.f32 %v1277, 1.0
        %v1301 = vadd.f32 %v1279, 1.0
        %v1302 = vadd.f32 %v1281, 1.0
        %v1303 = vadd.f32 %v1283, 1.0
        %v1304 = vadd.f32 %v1285, 1.0
        %v1305 = vadd.f32 %v1287, 1.0
        %v1306 = vadd.f32 %v1289, 1.0
        %v1307 = vadd.f32 %v1291, 1.0
        %v1308 = vrcp.pop %v1292
        %v1309 = vmul.f32 1.0, %v1308
        %v1310 = vrcp.pop %v1293
        %v1311 = vmul.f32 1.0, %v1310
        %v1312 = vrcp.pop %v1294
        %v1313 = vmul.f32 1.0, %v1312
        %v1314 = vrcp.pop %v1295
        %v1315 = vmul.f32 1.0, %v1314
        %v1316 = vrcp.pop %v1296
        %v1317 = vmul.f32 1.0, %v1316
        %v1318 = vrcp.pop %v1297
        %v1319 = vmul.f32 1.0, %v1318
        %v1320 = vrcp.pop %v1298
        %v1321 = vmul.f32 1.0, %v1320
        %v1322 = vrcp.pop %v1299
        %v1323 = vmul.f32 1.0, %v1322
        %v1324 = vrcp.pop %v1300
        %v1325 = vmul.f32 1.0, %v1324
        %v1326 = vrcp.pop %v1301
        %v1327 = vmul.f32 1.0, %v1326
        %v1328 = vrcp.pop %v1302
        %v1329 = vmul.f32 1.0, %v1328
        %v1330 = vrcp.pop %v1303
        %v1331 = vmul.f32 1.0, %v1330
        %v1332 = vrcp.pop %v1304
        %v1333 = vmul.f32 1.0, %v1332
        %v1334 = vrcp.pop %v1305
        %v1335 = vmul.f32 1.0, %v1334
        %v1336 = vrcp.pop %v1306
        %v1337 = vmul.f32 1.0, %v1336
        %v1338 = vrcp.pop %v1307
        %v1339 = vmul.f32 1.0, %v1338
        %v1340 = vmul.f32 %v1197, %v1038
        %v1341 = vmul.f32 %v1199, %v1043
        %v1342 = vmul.f32 %v1201, %v1048
        %v1343 = vmul.f32 %v1203, %v1053
        %v1344 = vmul.f32 %v1205, %v1058
        %v1345 = vmul.f32 %v1207, %v1063
        %v1346 = vmul.f32 %v1209, %v1068
        %v1347 = vmul.f32 %v1211, %v1073
        %v1348 = vmul.f32 %v1213, %v1078
        %v1349 = vmul.f32 %v1215, %v1083
        %v1350 = vmul.f32 %v1217, %v1088
        %v1351 = vmul.f32 %v1219, %v1093
        %v1352 = vmul.f32 %v1221, %v1098
        %v1353 = vmul.f32 %v1223, %v1103
        %v1354 = vmul.f32 %v1225, %v1108
        %v1355 = vmul.f32 %v1227, %v1113
        %v1356 = vadd.f32 %v667, %v1340
        %v1357 = vadd.f32 %v672, %v1341
        %v1358 = vadd.f32 %v677, %v1342
        %v1359 = vadd.f32 %v682, %v1343
        %v1360 = vadd.f32 %v687, %v1344
        %v1361 = vadd.f32 %v692, %v1345
        %v1362 = vadd.f32 %v697, %v1346
        %v1363 = vadd.f32 %v702, %v1347
        %v1364 = vadd.f32 %v707, %v1348
        %v1365 = vadd.f32 %v712, %v1349
        %v1366 = vadd.f32 %v717, %v1350
        %v1367 = vadd.f32 %v722, %v1351
        %v1368 = vadd.f32 %v727, %v1352
        %v1369 = vadd.f32 %v732, %v1353
        %v1370 = vadd.f32 %v737, %v1354
        %v1371 = vadd.f32 %v742, %v1355
        %v1372 = vtanh.pop %v1356
        %v1373 = vtanh.pop %v1357
        %v1374 = vtanh.pop %v1358
        %v1375 = vtanh.pop %v1359
        %v1376 = vtanh.pop %v1360
        %v1377 = vtanh.pop %v1361
        %v1378 = vtanh.pop %v1362
        %v1379 = vtanh.pop %v1363
        %v1380 = vtanh.pop %v1364
        %v1381 = vtanh.pop %v1365
        %v1382 = vtanh.pop %v1366
        %v1383 = vtanh.pop %v1367
        %v1384 = vtanh.pop %v1368
        %v1385 = vtanh.pop %v1369
        %v1386 = vtanh.pop %v1370
        %v1387 = vtanh.pop %v1371
        %v1388 = vsub.f32 1.0, %v1309
        %v1389 = vsub.f32 1.0, %v1311
        %v1390 = vsub.f32 1.0, %v1313
        %v1391 = vsub.f32 1.0, %v1315
        %v1392 = vsub.f32 1.0, %v1317
        %v1393 = vsub.f32 1.0, %v1319
        %v1394 = vsub.f32 1.0, %v1321
        %v1395 = vsub.f32 1.0, %v1323
        %v1396 = vsub.f32 1.0, %v1325
        %v1397 = vsub.f32 1.0, %v1327
        %v1398 = vsub.f32 1.0, %v1329
        %v1399 = vsub.f32 1.0, %v1331
        %v1400 = vsub.f32 1.0, %v1333
        %v1401 = vsub.f32 1.0, %v1335
        %v1402 = vsub.f32 1.0, %v1337
        %v1403 = vsub.f32 1.0, %v1339
        %v1404 = vmul.f32 %v1388, %v1372
        %v1405 = vmul.f32 %v1389, %v1373
        %v1406 = vmul.f32 %v1390, %v1374
        %v1407 = vmul.f32 %v1391, %v1375
        %v1408 = vmul.f32 %v1392, %v1376
        %v1409 = vmul.f32 %v1393, %v1377
        %v1410 = vmul.f32 %v1394, %v1378
        %v1411 = vmul.f32 %v1395, %v1379
        %v1412 = vmul.f32 %v1396, %v1380
        %v1413 = vmul.f32 %v1397, %v1381
        %v1414 = vmul.f32 %v1398, %v1382
        %v1415 = vmul.f32 %v1399, %v1383
        %v1416 = vmul.f32 %v1400, %v1384
        %v1417 = vmul.f32 %v1401, %v1385
        %v1418 = vmul.f32 %v1402, %v1386
        %v1419 = vmul.f32 %v1403, %v1387
        %v1420 = vmul.f32 %v1309, %v358
        %v1421 = vmul.f32 %v1311, %v359
        %v1422 = vmul.f32 %v1313, %v360
        %v1423 = vmul.f32 %v1315, %v361
        %v1424 = vmul.f32 %v1317, %v362
        %v1425 = vmul.f32 %v1319, %v363
        %v1426 = vmul.f32 %v1321, %v364
        %v1427 = vmul.f32 %v1323, %v365
        %v1428 = vmul.f32 %v1325, %v366
        %v1429 = vmul.f32 %v1327, %v367
        %v1430 = vmul.f32 %v1329, %v368
        %v1431 = vmul.f32 %v1331, %v369
        %v1432 = vmul.f32 %v1333, %v370
        %v1433 = vmul.f32 %v1335, %v371
        %v1434 = vmul.f32 %v1337, %v372
        %v1435 = vmul.f32 %v1339, %v373
        %v1436 = vadd.f32 %v1404, %v1420
        %v1437 = vadd.f32 %v1405, %v1421
        %v1438 = vadd.f32 %v1406, %v1422
        %v1439 = vadd.f32 %v1407, %v1423
        %v1440 = vadd.f32 %v1408, %v1424
        %v1441 = vadd.f32 %v1409, %v1425
        %v1442 = vadd.f32 %v1410, %v1426
        %v1443 = vadd.f32 %v1411, %v1427
        %v1444 = vadd.f32 %v1412, %v1428
        %v1445 = vadd.f32 %v1413, %v1429
        %v1446 = vadd.f32 %v1414, %v1430
        %v1447 = vadd.f32 %v1415, %v1431
        %v1448 = vadd.f32 %v1416, %v1432
        %v1449 = vadd.f32 %v1417, %v1433
        %v1450 = vadd.f32 %v1418, %v1434
        %v1451 = vadd.f32 %v1419, %v1435
        %1452 = vst [vmem:[%s338] sm:$0xff] %v1436
        %1453 = vst [vmem:[%s338 + $0x8] sm:$0xff] %v1437
        %1454 = vst [vmem:[%s338 + $0x10] sm:$0xff] %v1438
        %1455 = vst [vmem:[%s338 + $0x18] sm:$0xff] %v1439
        %1456 = vst [vmem:[%s338 + $0x20] sm:$0xff] %v1440
        %1457 = vst [vmem:[%s338 + $0x28] sm:$0xff] %v1441
        %1458 = vst [vmem:[%s338 + $0x30] sm:$0xff] %v1442
        %1459 = vst [vmem:[%s338 + $0x38] sm:$0xff] %v1443
        %1460 = vst [vmem:[%s338 + $0x40] sm:$0xff] %v1444
        %1461 = vst [vmem:[%s338 + $0x48] sm:$0xff] %v1445
        %1462 = vst [vmem:[%s338 + $0x50] sm:$0xff] %v1446
        %1463 = vst [vmem:[%s338 + $0x58] sm:$0xff] %v1447
        %1464 = vst [vmem:[%s338 + $0x60] sm:$0xff] %v1448
        %1465 = vst [vmem:[%s338 + $0x68] sm:$0xff] %v1449
        %1466 = vst [vmem:[%s338 + $0x70] sm:$0xff] %v1450
        %1467 = vst [vmem:[%s338 + $0x78] sm:$0xff] %v1451
        %s1468 = sand.u32 %s171, 1
        %s1469 = scalar_lea.sflag [#allocation4], %s1468
        %s1470 = sand.u32 %s171, 1
        %s1471 = smul.addr %s1470, 128
        %s1472 = scalar_lea.vmem [#allocation10], %s1471
        // Predicated region
        $region61: #{tpu_custom_call.1} parent=43 // pred_check
          %p1473 = pneg %p181
        $region62: #{tpu_custom_call.1} parent=43 // pred_check_branch
          %1475 = sbr.rel (%p1473) target = $region64
        $region63: #{tpu_custom_call.1} parent=43 // pred_region
          %s1476 = smul.u32 16, %s27
          %s1478 = ssub.s32 2048, 2048
          %1479 = vsyncadd %s1469, %s1478
          %s1480 = smul.addr %s1476, 128
          %s1481 = scalar_lea.hbm %s6, %s1480
          %s1482 = sshll.u32 %s1472, 4
          %s1483 = int_to_ptr.vmem [resolvable:$true] %s1482
          %1488 = dma.vmem_to_hbm [thread:$0]  %s1483, 2048, %s1481, %s1469, 128, 128, 8
        $region64: #{tpu_custom_call.1} parent=43 // pred_fallthru
          _
      $region44: #{tpu_custom_call.1} parent=5 // pred_fallthru
        _
      %p1489 = scmp.le.s32.totalorder 2, %s22
      // Predicated region
      $region65: #{tpu_custom_call.1} parent=5 // pred_check
        %p1490 = pneg %p1489
      $region66: #{tpu_custom_call.1} parent=5 // pred_check_branch
        %1492 = sbr.rel (%p1490) target = $region68
      $region67: #{tpu_custom_call.1} parent=5 // pred_region
        %s1493 = ssub.s32 %s22, 2
        // Predicated region
        $region69: #{tpu_custom_call.1} parent=67 // pred_check
          %p1494 = pneg %p187
        $region70: #{tpu_custom_call.1} parent=67 // pred_check_branch
          %1496 = sbr.rel (%p1494) target = $region72
        $region71: #{tpu_custom_call.1} parent=67 // pred_region
          %s1497 = sand.u32 %s172, 1
          %s1498 = scalar_lea.sflag [#allocation4], %s1497
          %s1499 = sand.u32 %s172, 1
          %s1500 = smul.addr %s1499, 128
          %s1501 = scalar_lea.vmem [#allocation10], %s1500
          %1502 = dma.done %s1498, 2048
        $region72: #{tpu_custom_call.1} parent=67 // pred_fallthru
          _
      $region68: #{tpu_custom_call.1} parent=5 // pred_fallthru
        _
    $region6: #{tpu_custom_call.1} parent=1 // loop_footer
      %s26 = sadd.s32 1, %s22
    $region7: #{tpu_custom_call.1} parent=1 // loop_footer_branch
      %21 = sbr.rel target = $region3
    $region8: #{tpu_custom_call.1} parent=1 // loop_exit
      _
    %1503 = vsyncpa [#allocation3], 1
    %s1504 = scalar_lea.sflag [#allocation3], 1
    %1505 = vsyncpa %s1504, 1
    %1506 = vsyncpa [#allocation6], 1
    %s1507 = scalar_lea.sflag [#allocation6], 1
    %1508 = vsyncpa %s1507, 1
    %1509 = vsyncpa [#allocation9], 1
    %1510 = vsyncpa [#allocation4], 1
    %s1511 = scalar_lea.sflag [#allocation4], 1
    %1512 = vsyncpa %s1511, 1

</llo_original>
